<compile_context>
chip_gen: v7x
topology: tpu7x:2x2x1
jax: 0.10.0
libtpu: 0.0.40
codegen_flags: <defaults>
</compile_context>

<pallas_src>
import jax
import jax.numpy as jnp
from jax.experimental import pallas as pl
from jax.experimental.pallas import tpu as pltpu

# ----------------------------- hyper-parameters ------------------------------
NUM_PLAYERS = 2
STATE_DIM = (4, 3, 3)                     # (channels = 2*num_players, H, W) coins grid
GAMMA = 0.9
N_LATENT = 32                             # n_latent_var
N_LATENT_Q = N_LATENT // 4                # critic second hidden layer
NUM_TRANSITION_CLASSES = STATE_DIM[1] * STATE_DIM[2]        # H*W = 9
CLASSIFIER_OUT_DIMS = NUM_PLAYERS * 2                        # 4 output heads
STATE_FLAT = STATE_DIM[0] * STATE_DIM[1] * STATE_DIM[2]      # 36
INPUT_DIMS = NUM_PLAYERS + STATE_FLAT + 1                    # 39
CF_INPUT_DIMS = NUM_PLAYERS - 1 + STATE_FLAT + 1             # 38

LANES = 128
FEAT = INPUT_DIMS + CF_INPUT_DIMS                            # 77: [joint | counterfactual]
HID2 = 2 * N_LATENT                                          # 64: block-diag hidden
LOGITS2 = 2 * CLASSIFIER_OUT_DIMS * NUM_TRANSITION_CLASSES   # 72: joint+cf logits
VHID1 = 2 * N_LATENT                                         # 64
VHID2 = 2 * N_LATENT_Q                                       # 16


def _round8(x):
    return (x + 7) // 8 * 8


FEAT_PAD = _round8(FEAT)                                     # 80

# ------------------------- packed weight-slab layout --------------------------
_ROWS = {}
_off = 0
for _name, _h in [("RW1", FEAT_PAD), ("TW1", FEAT_PAD), ("RW2", HID2), ("TW2", HID2),
                  ("SEG", LOGITS2), ("VW1", LOGITS2), ("VW2", HID2),
                  ("RW3", HID2), ("VW3", VHID2), ("BIAS", 8)]:
    _ROWS[_name] = _off
    _off += _round8(_h)
W_SLAB_ROWS = _off                                           # 584


# --------------------------------- kernel ------------------------------------
def voi_kernel(x_ref, w_ref, o_ref):
    """x_ref: (TILE_N, FEAT_PAD) packed [joint | cf] inputs; w_ref: (584,128) slab."""
    xx = x_ref[...]                                          # f32

    def dot_bf16(a, b):
        # bf16 MXU matmul, f32 accumulation; elementwise path stays f32.
        return jnp.dot(a.astype(jnp.bfloat16), b.astype(jnp.bfloat16),
                       preferred_element_type=jnp.float32)

    def wmat(name, h, w):
        r = _ROWS[name]
        return w_ref[r:r + h, 0:w]                           # static slice: cheap VMEM load

    bias = w_ref[_ROWS["BIAS"]:_ROWS["BIAS"] + 8, :]         # (8, 128) f32 bias block
    rb1 = bias[0:1, 0:HID2]
    tb1 = bias[1:2, 0:HID2]
    rb2 = bias[2:3, 0:HID2]
    tb2 = bias[3:4, 0:LOGITS2]
    vb1 = bias[4:5, 0:VHID1]
    vb2 = bias[5:6, 0:VHID2]
    rb3 = bias[6:7, :]

    # fused joint + counterfactual reward estimator (block-diag weights) -------
    h_r1 = jnp.maximum(dot_bf16(xx, wmat("RW1", FEAT_PAD, HID2)) + rb1, 0.0)
    h_r2 = jnp.maximum(dot_bf16(h_r1, wmat("RW2", HID2, HID2)) + rb2, 0.0)

    # fused joint + counterfactual transition classifier (block-diag) ----------
    h_t1 = jnp.maximum(dot_bf16(xx, wmat("TW1", FEAT_PAD, HID2)) + tb1, 0.0)
    logits = dot_bf16(h_t1, wmat("TW2", HID2, LOGITS2)) + tb2       # (TILE_N, 72)

    # vectorized per-head softmax: row-max shift (same constant within each
    # head -> exact), full-width exp, MXU segment-sum, EUP reciprocal.
    m = jnp.max(logits, axis=-1, keepdims=True)
    e = jnp.exp(logits - m)
    denom = jnp.dot(e, wmat("SEG", LOGITS2, LOGITS2),
                    preferred_element_type=jnp.float32)
    probs = e * pl.reciprocal(denom, approx=True)            # [E[s'|joint] | E[s'|cf]]

    # TODO(synk): compute_transition_value source not provided; implemented as
    #   V_player(E[s'|joint]) - V_player(E[s'|cf]) with the shared Critic, fused
    #   here as one block-diagonal chain over both expected states.
    h_v1 = jnp.maximum(dot_bf16(probs, wmat("VW1", LOGITS2, VHID1)) + vb1, 0.0)
    h_v2 = jnp.maximum(dot_bf16(h_v1, wmat("VW2", VHID1, VHID2)) + vb2, 0.0)

    # final heads: influenced-player column, joint-minus-cf sign and gamma are
    # folded into column-replicated (.,128) weights -> lane-dense output store.
    voi = (dot_bf16(h_r2, wmat("RW3", HID2, LANES)) + rb3
           + dot_bf16(h_v2, wmat("VW3", VHID2, LANES)))
    o_ref[...] = voi


# ------------------------------ parameter init --------------------------------
def _dense(key, fan_in, fan_out):
    kw, kb = jax.random.split(key)
    scale = 1.0 / jnp.sqrt(jnp.float32(fan_in))
    w = jax.random.normal(kw, (fan_in, fan_out), jnp.float32) * scale
    b = jax.random.normal(kb, (1, fan_out), jnp.float32) * 0.01
    return w, b


def init_params(key):
    keys = jax.random.split(key, 32)
    it = iter(keys)
    params = {}

    # TODO(synk): ScalarPredictor / DiscreteClassifier / Critic bodies are not
    # in the reference source; canonical MLP forms assumed below.
    def scalar_predictor(in_dim):          # Linear->ReLU->Linear->ReLU->Linear
        return (_dense(next(it), in_dim, N_LATENT)
                + _dense(next(it), N_LATENT, N_LATENT)
                + _dense(next(it), N_LATENT, NUM_PLAYERS))

    def classifier(in_dim):                # Linear->ReLU->Linear, per-head softmax
        return (_dense(next(it), in_dim, N_LATENT)
                + _dense(next(it), N_LATENT, CLASSIFIER_OUT_DIMS * NUM_TRANSITION_CLASSES))

    def critic():                          # Linear->ReLU->Linear->ReLU->Linear
        return (_dense(next(it), STATE_FLAT, N_LATENT)
                + _dense(next(it), N_LATENT, N_LATENT_Q)
                + _dense(next(it), N_LATENT_Q, NUM_PLAYERS))

    params["reward"] = scalar_predictor(INPUT_DIMS)
    params["cf_reward"] = [scalar_predictor(CF_INPUT_DIMS) for _ in range(NUM_PLAYERS)]
    params["transition"] = classifier(INPUT_DIMS)
    params["cf_transition"] = [classifier(CF_INPUT_DIMS) for _ in range(NUM_PLAYERS)]
    params["critic"] = critic()
    return params


# ----------------------------- weight slab packing -----------------------------
def pack_weights(params, influencer_idx, influenced_idx, gamma):
    f32 = jnp.float32
    rw1, rb1, rw2, rb2, rw3, rb3 = params["reward"]
    cw1, cb1, cw2, cb2, cw3, cb3 = params["cf_reward"][influencer_idx]
    tw1, tb1, tw2, tb2 = params["transition"]
    xw1, xb1, xw2, xb2 = params["cf_transition"][influencer_idx]
    vw1, vb1, vw2, vb2, vw3, vb3 = params["critic"]

    def blockdiag(a, b):
        ra, ca = a.shape
        rb_, cb_ = b.shape
        out = jnp.zeros((ra + rb_, ca + cb_), f32)
        out = out.at[:ra, :ca].set(a)
        return out.at[ra:, ca:].set(b)

    entries = [
        ("RW1", blockdiag(rw1, cw1)),                         # (77, 64)
        ("TW1", blockdiag(tw1, xw1)),                         # (77, 64)
        ("RW2", blockdiag(rw2, cw2)),                         # (64, 64)
        ("TW2", blockdiag(tw2, xw2)),                         # (64, 72)
        ("SEG", jnp.kron(jnp.eye(2 * CLASSIFIER_OUT_DIMS, dtype=f32),
                         jnp.ones((NUM_TRANSITION_CLASSES, NUM_TRANSITION_CLASSES), f32))),
        ("VW1", blockdiag(vw1, vw1)),                         # (72, 64) shared critic
        ("VW2", blockdiag(vw2, vw2)),                         # (64, 16)
    ]

    # final heads: pre-slice the influenced-player column, fold the joint-minus-
    # counterfactual sign (and gamma for the critic head); replicate to 128 lanes
    # so the kernel's final matmuls directly produce a lane-dense output tile.
    rcol = rw3[:, influenced_idx:influenced_idx + 1]
    ccol = cw3[:, influenced_idx:influenced_idx + 1]
    rw3_fold = jnp.concatenate([rcol, -ccol], axis=0)         # (64, 1)
    entries.append(("RW3", jnp.tile(rw3_fold, (1, LANES))))
    vcol = vw3[:, influenced_idx:influenced_idx + 1]
    vw3_fold = gamma * jnp.concatenate([vcol, -vcol], axis=0)  # (16, 1); critic bias cancels
    entries.append(("VW3", jnp.tile(vw3_fold, (1, LANES))))

    bias_block = jnp.zeros((8, LANES), f32)
    bias_block = bias_block.at[0, :HID2].set(jnp.concatenate([rb1, cb1], axis=1)[0])
    bias_block = bias_block.at[1, :HID2].set(jnp.concatenate([tb1, xb1], axis=1)[0])
    bias_block = bias_block.at[2, :HID2].set(jnp.concatenate([rb2, cb2], axis=1)[0])
    bias_block = bias_block.at[3, :LOGITS2].set(jnp.concatenate([tb2, xb2], axis=1)[0])
    bias_block = bias_block.at[4, :VHID1].set(jnp.concatenate([vb1, vb1], axis=1)[0])
    bias_block = bias_block.at[5, :VHID2].set(jnp.concatenate([vb2, vb2], axis=1)[0])
    rb3_scalar = rb3[0, influenced_idx] - cb3[0, influenced_idx]
    bias_block = bias_block.at[6, :].set(jnp.full((LANES,), rb3_scalar, f32))
    entries.append(("BIAS", bias_block))

    slab = jnp.zeros((W_SLAB_ROWS, LANES), f32)
    for name, mat in entries:
        r = _ROWS[name]
        h, w = mat.shape
        slab = slab.at[r:r + h, :w].set(mat.astype(f32))
    return slab


# --------------------------------- wrapper ------------------------------------
def preprocess_inputs(states, joint_actions):
    """states: (T, bsz, C, H, W); joint_actions: (T, bsz, P) -> (T*bsz, P + C*H*W + 1)."""
    T, bsz = joint_actions.shape[:2]
    time_remaining = jnp.arange(T - 1, -1, -1, dtype=jnp.float32)
    time_remaining = jnp.broadcast_to(time_remaining[:, None], (T, bsz))
    flat_states = states.reshape(T, bsz, -1).astype(jnp.float32)
    inputs = jnp.concatenate(
        [joint_actions.astype(jnp.float32), flat_states, time_remaining[..., None]],
        axis=-1)
    return inputs.reshape(T * bsz, -1)


def _choose_tiling(n):
    # Biggest tile up to 512 rows, but at least two grid steps so both v7x
    # TensorCores get work (the extra padded tile is a cheap no-op on v5e/v6e).
    tile = ((max(1, (n + 1) // 2) + 127) // 128) * 128
    tile = min(512, max(128, tile))
    n_tiles = -(-n // tile)
    if n_tiles % 2:
        n_tiles += 1
    return tile, n_tiles


def coins_voi_forward(params, states, joint_actions, influencer_idx, influenced_idx,
                      gamma=GAMMA):
    joint_inputs = preprocess_inputs(states, joint_actions)                   # (N, 39)
    marg_actions = jnp.concatenate(
        [joint_actions[..., :influencer_idx], joint_actions[..., influencer_idx + 1:]],
        axis=-1)
    marg_inputs = preprocess_inputs(states, marg_actions)                     # (N, 38)

    xx = jnp.concatenate([joint_inputs, marg_inputs], axis=-1)                # (N, 77)
    n = xx.shape[0]
    tile_n, n_tiles = _choose_tiling(n)
    padded_n = tile_n * n_tiles
    xx = jnp.pad(xx, ((0, padded_n - n), (0, FEAT_PAD - FEAT)))               # (padded_n, 80)

    w_slab = pack_weights(params, int(influencer_idx), int(influenced_idx), float(gamma))

    out = pl.pallas_call(
        voi_kernel,
        out_shape=jax.ShapeDtypeStruct((padded_n, LANES), jnp.float32),
        grid=(n_tiles,),
        in_specs=[
            pl.BlockSpec((tile_n, FEAT_PAD), lambda i: (i, 0)),
            pl.BlockSpec((W_SLAB_ROWS, LANES), lambda i: (0, 0)),   # grid-invariant slab
        ],
        out_specs=pl.BlockSpec((tile_n, LANES), lambda i: (i, 0)),  # lane-dense output
        compiler_params=pltpu.CompilerParams(
            dimension_semantics=("parallel",)),
    )(xx, w_slab)

    return out[:n, 0]                     # all 128 output lanes are identical; take lane 0


# ----------------------------- pure-JAX reference ------------------------------
def _dot_bf16(a, b):
    return jnp.dot(a.astype(jnp.bfloat16), b.astype(jnp.bfloat16),
                   preferred_element_type=jnp.float32)


def voi_reference(params, states, joint_actions, influencer_idx, influenced_idx,
                  gamma=GAMMA):
    x = preprocess_inputs(states, joint_actions)
    marg = jnp.concatenate(
        [joint_actions[..., :influencer_idx], joint_actions[..., influencer_idx + 1:]],
        axis=-1)
    xc = preprocess_inputs(states, marg)

    def mlp3(v, p):
        w1, b1, w2, b2, w3, b3 = p
        h = jax.nn.relu(_dot_bf16(v, w1) + b1)
        h = jax.nn.relu(_dot_bf16(h, w2) + b2)
        return _dot_bf16(h, w3) + b3

    def classifier_probs(v, p):
        w1, b1, w2, b2 = p
        h = jax.nn.relu(_dot_bf16(v, w1) + b1)
        logits = _dot_bf16(h, w2) + b2
        lg = logits.reshape(-1, CLASSIFIER_OUT_DIMS, NUM_TRANSITION_CLASSES)
        return jax.nn.softmax(lg, axis=-1).reshape(-1, STATE_FLAT)

    reward = mlp3(x, params["reward"])[:, influenced_idx]
    cf_reward = mlp3(xc, params["cf_reward"][influencer_idx])[:, influenced_idx]
    immediate = reward - cf_reward

    exp_next = classifier_probs(x, params["transition"])
    cf_exp_next = classifier_probs(xc, params["cf_transition"][influencer_idx])
    v = mlp3(exp_next, params["critic"])[:, influenced_idx]
    v_cf = mlp3(cf_exp_next, params["critic"])[:, influenced_idx]
    return immediate + gamma * (v - v_cf)


# ----------------------------------- main --------------------------------------
if __name__ == "__main__":
    key = jax.random.PRNGKey(0)
    k_params, k_states, k_actions = jax.random.split(key, 3)

    params = init_params(k_params)

    T, bsz = 8, 16                                          # N = 128 samples
    C, H, W = STATE_DIM
    positions = jax.random.randint(k_states, (T, bsz, C), 0, H * W)
    states = jax.nn.one_hot(positions, H * W, dtype=jnp.float32).reshape(T, bsz, C, H, W)
    joint_actions = jax.random.randint(k_actions, (T, bsz, NUM_PLAYERS), 0, 4)

    voi = coins_voi_forward(params, states, joint_actions,
                            influencer_idx=0, influenced_idx=1)
    voi = jax.block_until_ready(voi)
    assert voi.shape == (T * bsz,)
    assert bool(jnp.all(jnp.isfinite(voi)))

    ref = jax.block_until_ready(
        voi_reference(params, states, joint_actions, 0, 1))
    assert bool(jnp.allclose(voi, ref, atol=5e-2, rtol=5e-2)), \
        float(jnp.max(jnp.abs(voi - ref)))

    print("KERNEL_OK")
</pallas_src>

<mosaic_0001>
module attributes {stable_mosaic.version = 11 : i64} {
  func.func @voi_kernel(%arg0: i32, %arg1: memref<128x80xf32, #tpu.memory_space<vmem>>, %arg2: memref<584x128xf32, #tpu.memory_space<vmem>>, %arg3: memref<128x128xf32, #tpu.memory_space<vmem>>) attributes {dimension_semantics = [#tpu.dimension_semantics<parallel>], iteration_bounds = array<i64: 2>, scalar_prefetch = 0 : i64, scratch_operands = 0 : i64, tpu.core_type = #tpu.core_type<tc>, window_params = [{transform_indices = @transform_0, window_bounds = array<i64: 128, 80>}, {pipeline_mode = #tpu.pipeline_mode<synchronous>, transform_indices = @transform_1, window_bounds = array<i64: 584, 128>}, {transform_indices = @transform_2, window_bounds = array<i64: 128, 128>}]} {
    %c0 = arith.constant 0 : index
    %c0_0 = arith.constant 0 : index
    %0 = vector.load %arg1[%c0, %c0_0] : memref<128x80xf32, #tpu.memory_space<vmem>>, vector<128x80xf32>
    %c576 = arith.constant 576 : index
    %c0_1 = arith.constant 0 : index
    %1 = vector.load %arg2[%c576, %c0_1] : memref<584x128xf32, #tpu.memory_space<vmem>>, vector<8x128xf32>
    %2 = vector.extract_strided_slice %1 {offsets = [0, 0], sizes = [1, 64], strides = [1, 1]} : vector<8x128xf32> to vector<1x64xf32>
    %3 = vector.extract_strided_slice %1 {offsets = [1, 0], sizes = [1, 64], strides = [1, 1]} : vector<8x128xf32> to vector<1x64xf32>
    %4 = vector.extract_strided_slice %1 {offsets = [2, 0], sizes = [1, 64], strides = [1, 1]} : vector<8x128xf32> to vector<1x64xf32>
    %5 = vector.extract_strided_slice %1 {offsets = [3, 0], sizes = [1, 72], strides = [1, 1]} : vector<8x128xf32> to vector<1x72xf32>
    %6 = vector.extract_strided_slice %1 {offsets = [4, 0], sizes = [1, 64], strides = [1, 1]} : vector<8x128xf32> to vector<1x64xf32>
    %7 = vector.extract_strided_slice %1 {offsets = [5, 0], sizes = [1, 16], strides = [1, 1]} : vector<8x128xf32> to vector<1x16xf32>
    %8 = vector.extract_strided_slice %1 {offsets = [6, 0], sizes = [1, 128], strides = [1, 1]} : vector<8x128xf32> to vector<1x128xf32>
    %c0_2 = arith.constant 0 : index
    %c0_3 = arith.constant 0 : index
    %9 = vector.load %arg2[%c0_2, %c0_3] : memref<584x128xf32, #tpu.memory_space<vmem>>, vector<80x64xf32>
    %10 = arith.truncf %0 : vector<128x80xf32> to vector<128x80xbf16>
    %11 = arith.truncf %9 : vector<80x64xf32> to vector<80x64xbf16>
    %cst = arith.constant dense<0.000000e+00> : vector<128x64xf32>
    %12 = tpu.matmul %10, %11, %cst {dimension_numbers = #tpu.dot_dimension_numbers<[1], [0], [0], [1], [0, 0, 1, 1], [], []>} : vector<128x80xbf16>, vector<80x64xbf16>, vector<128x64xf32> -> vector<128x64xf32>
    %13 = vector.broadcast %2 : vector<1x64xf32> to vector<128x64xf32>
    %14 = arith.addf %12, %13 : vector<128x64xf32>
    %cst_4 = arith.constant 0.000000e+00 : f32
    %15 = vector.broadcast %cst_4 : f32 to vector<128x64xf32>
    %16 = arith.maximumf %14, %15 : vector<128x64xf32>
    %c160 = arith.constant 160 : index
    %c0_5 = arith.constant 0 : index
    %17 = vector.load %arg2[%c160, %c0_5] : memref<584x128xf32, #tpu.memory_space<vmem>>, vector<64x64xf32>
    %18 = arith.truncf %16 : vector<128x64xf32> to vector<128x64xbf16>
    %19 = arith.truncf %17 : vector<64x64xf32> to vector<64x64xbf16>
    %cst_6 = arith.constant dense<0.000000e+00> : vector<128x64xf32>
    %20 = tpu.matmul %18, %19, %cst_6 {dimension_numbers = #tpu.dot_dimension_numbers<[1], [0], [0], [1], [0, 0, 1, 1], [], []>} : vector<128x64xbf16>, vector<64x64xbf16>, vector<128x64xf32> -> vector<128x64xf32>
    %21 = vector.broadcast %4 : vector<1x64xf32> to vector<128x64xf32>
    %22 = arith.addf %20, %21 : vector<128x64xf32>
    %cst_7 = arith.constant 0.000000e+00 : f32
    %23 = vector.broadcast %cst_7 : f32 to vector<128x64xf32>
    %24 = arith.maximumf %22, %23 : vector<128x64xf32>
    %c80 = arith.constant 80 : index
    %c0_8 = arith.constant 0 : index
    %25 = vector.load %arg2[%c80, %c0_8] : memref<584x128xf32, #tpu.memory_space<vmem>>, vector<80x64xf32>
    %26 = arith.truncf %0 : vector<128x80xf32> to vector<128x80xbf16>
    %27 = arith.truncf %25 : vector<80x64xf32> to vector<80x64xbf16>
    %cst_9 = arith.constant dense<0.000000e+00> : vector<128x64xf32>
    %28 = tpu.matmul %26, %27, %cst_9 {dimension_numbers = #tpu.dot_dimension_numbers<[1], [0], [0], [1], [0, 0, 1, 1], [], []>} : vector<128x80xbf16>, vector<80x64xbf16>, vector<128x64xf32> -> vector<128x64xf32>
    %29 = vector.broadcast %3 : vector<1x64xf32> to vector<128x64xf32>
    %30 = arith.addf %28, %29 : vector<128x64xf32>
    %cst_10 = arith.constant 0.000000e+00 : f32
    %31 = vector.broadcast %cst_10 : f32 to vector<128x64xf32>
    %32 = arith.maximumf %30, %31 : vector<128x64xf32>
    %c224 = arith.constant 224 : index
    %c0_11 = arith.constant 0 : index
    %33 = vector.load %arg2[%c224, %c0_11] : memref<584x128xf32, #tpu.memory_space<vmem>>, vector<64x72xf32>
    %34 = arith.truncf %32 : vector<128x64xf32> to vector<128x64xbf16>
    %35 = arith.truncf %33 : vector<64x72xf32> to vector<64x72xbf16>
    %cst_12 = arith.constant dense<0.000000e+00> : vector<128x72xf32>
    %36 = tpu.matmul %34, %35, %cst_12 {dimension_numbers = #tpu.dot_dimension_numbers<[1], [0], [0], [1], [0, 0, 1, 1], [], []>} : vector<128x64xbf16>, vector<64x72xbf16>, vector<128x72xf32> -> vector<128x72xf32>
    %37 = vector.broadcast %5 : vector<1x72xf32> to vector<128x72xf32>
    %38 = arith.addf %36, %37 : vector<128x72xf32>
    %cst_13 = arith.constant dense<0xFF800000> : vector<128xf32>
    %39 = vector.multi_reduction <maximumf>, %38, %cst_13 [1] : vector<128x72xf32> to vector<128xf32>
    %40 = vector.shape_cast %39 : vector<128xf32> to vector<128x1xf32>
    %41 = vector.broadcast %40 : vector<128x1xf32> to vector<128x72xf32>
    %42 = arith.subf %38, %41 : vector<128x72xf32>
    %43 = math.exp %42 : vector<128x72xf32>
    %c288 = arith.constant 288 : index
    %c0_14 = arith.constant 0 : index
    %44 = vector.load %arg2[%c288, %c0_14] : memref<584x128xf32, #tpu.memory_space<vmem>>, vector<72x72xf32>
    %cst_15 = arith.constant dense<0.000000e+00> : vector<128x72xf32>
    %45 = tpu.matmul %43, %44, %cst_15 {dimension_numbers = #tpu.dot_dimension_numbers<[1], [0], [0], [1], [0, 0, 1, 1], [], []>} : vector<128x72xf32>, vector<72x72xf32>, vector<128x72xf32> -> vector<128x72xf32>
    %46 = tpu.reciprocal %45 {approx = true} : vector<128x72xf32> -> vector<128x72xf32>
    %47 = arith.mulf %43, %46 : vector<128x72xf32>
    %c360 = arith.constant 360 : index
    %c0_16 = arith.constant 0 : index
    %48 = vector.load %arg2[%c360, %c0_16] : memref<584x128xf32, #tpu.memory_space<vmem>>, vector<72x64xf32>
    %49 = arith.truncf %47 : vector<128x72xf32> to vector<128x72xbf16>
    %50 = arith.truncf %48 : vector<72x64xf32> to vector<72x64xbf16>
    %cst_17 = arith.constant dense<0.000000e+00> : vector<128x64xf32>
    %51 = tpu.matmul %49, %50, %cst_17 {dimension_numbers = #tpu.dot_dimension_numbers<[1], [0], [0], [1], [0, 0, 1, 1], [], []>} : vector<128x72xbf16>, vector<72x64xbf16>, vector<128x64xf32> -> vector<128x64xf32>
    %52 = vector.broadcast %6 : vector<1x64xf32> to vector<128x64xf32>
    %53 = arith.addf %51, %52 : vector<128x64xf32>
    %cst_18 = arith.constant 0.000000e+00 : f32
    %54 = vector.broadcast %cst_18 : f32 to vector<128x64xf32>
    %55 = arith.maximumf %53, %54 : vector<128x64xf32>
    %c432 = arith.constant 432 : index
    %c0_19 = arith.constant 0 : index
    %56 = vector.load %arg2[%c432, %c0_19] : memref<584x128xf32, #tpu.memory_space<vmem>>, vector<64x16xf32>
    %57 = arith.truncf %55 : vector<128x64xf32> to vector<128x64xbf16>
    %58 = arith.truncf %56 : vector<64x16xf32> to vector<64x16xbf16>
    %cst_20 = arith.constant dense<0.000000e+00> : vector<128x16xf32>
    %59 = tpu.matmul %57, %58, %cst_20 {dimension_numbers = #tpu.dot_dimension_numbers<[1], [0], [0], [1], [0, 0, 1, 1], [], []>} : vector<128x64xbf16>, vector<64x16xbf16>, vector<128x16xf32> -> vector<128x16xf32>
    %60 = vector.broadcast %7 : vector<1x16xf32> to vector<128x16xf32>
    %61 = arith.addf %59, %60 : vector<128x16xf32>
    %cst_21 = arith.constant 0.000000e+00 : f32
    %62 = vector.broadcast %cst_21 : f32 to vector<128x16xf32>
    %63 = arith.maximumf %61, %62 : vector<128x16xf32>
    %c496 = arith.constant 496 : index
    %c0_22 = arith.constant 0 : index
    %64 = vector.load %arg2[%c496, %c0_22] : memref<584x128xf32, #tpu.memory_space<vmem>>, vector<64x128xf32>
    %65 = arith.truncf %24 : vector<128x64xf32> to vector<128x64xbf16>
    %66 = arith.truncf %64 : vector<64x128xf32> to vector<64x128xbf16>
    %cst_23 = arith.constant dense<0.000000e+00> : vector<128x128xf32>
    %67 = tpu.matmul %65, %66, %cst_23 {dimension_numbers = #tpu.dot_dimension_numbers<[1], [0], [0], [1], [0, 0, 1, 1], [], []>} : vector<128x64xbf16>, vector<64x128xbf16>, vector<128x128xf32> -> vector<128x128xf32>
    %68 = vector.broadcast %8 : vector<1x128xf32> to vector<128x128xf32>
    %69 = arith.addf %67, %68 : vector<128x128xf32>
    %c560 = arith.constant 560 : index
    %c0_24 = arith.constant 0 : index
    %70 = vector.load %arg2[%c560, %c0_24] : memref<584x128xf32, #tpu.memory_space<vmem>>, vector<16x128xf32>
    %71 = arith.truncf %63 : vector<128x16xf32> to vector<128x16xbf16>
    %72 = arith.truncf %70 : vector<16x128xf32> to vector<16x128xbf16>
    %cst_25 = arith.constant dense<0.000000e+00> : vector<128x128xf32>
    %73 = tpu.matmul %71, %72, %cst_25 {dimension_numbers = #tpu.dot_dimension_numbers<[1], [0], [0], [1], [0, 0, 1, 1], [], []>} : vector<128x16xbf16>, vector<16x128xbf16>, vector<128x128xf32> -> vector<128x128xf32>
    %74 = arith.addf %69, %73 : vector<128x128xf32>
    %c0_26 = arith.constant 0 : index
    %c0_27 = arith.constant 0 : index
    %75 = vector.load %arg3[%c0_26, %c0_27] : memref<128x128xf32, #tpu.memory_space<vmem>>, vector<128x128xf32>
    tpu.vector_store %arg3[%c0_26, %c0_27], %74 {strides = array<i32>} : memref<128x128xf32, #tpu.memory_space<vmem>>, vector<128x128xf32>,
    return
  }
  func.func @transform_0(%arg0: i32) -> (i32, i32) {
    %c0_i32 = arith.constant 0 : i32
    %c0_i32_0 = arith.constant 0 : i32
    return %arg0, %c0_i32 : i32, i32
  }
  func.func @transform_1(%arg0: i32) -> (i32, i32) {
    %c0_i32 = arith.constant 0 : i32
    %c0_i32_0 = arith.constant 0 : i32
    %c0_i32_1 = arith.constant 0 : i32
    return %c0_i32, %c0_i32_0 : i32, i32
  }
  func.func @transform_2(%arg0: i32) -> (i32, i32) {
    %c0_i32 = arith.constant 0 : i32
    %c0_i32_0 = arith.constant 0 : i32
    return %arg0, %c0_i32 : i32, i32
  }
}

</mosaic_0001>

<llo_original>
// kernel: tpu_custom_call.1
$region0: #{tpu_custom_call.1}
  #allocation0 [shape = 'u32[]', space=smem, size = 0x4, offset = 0x4, fixed_abs, tag = 'smem constant byte address 0x4 - core index']
  #allocation1 [shape = 'u32[144,128]{1,0:T(1,128)}', space=vmem, size = 0x12000, scoped, tag = 'internal scratch']
  %s0 = inlined_call_operand.vmem [shape: f32[256,80], index: 0, kind: input, shape index: {}]
  %s1 = inlined_call_operand.hbm [shape: f32[584,128], index: 1, kind: input, shape index: {}]
  %s2 = inlined_call_operand.hbm [shape: f32[256,128], index: 2, kind: output, shape index: {}]
  %s3 = sld [smem:[#allocation0]]
  $region45: #{tpu_custom_call.1} parent=0
    _
  %s5 = ssub.s32 1, %s3
  %s6 = scalar_select 0, %s5, %s3
  $region1: #{tpu_custom_call.1} parent=0
    #allocation2 [shape = 'u8[299008]{0}', space=vmem, size = 0x49000, scoped, tag = 'input window, operand 1, single buffered']
    #allocation3 [shape = 's32[2]{0}', space=sflag, size = 0x8, scoped, tag = 'scoped memory for tpu_custom_call.1']
    #allocation4 [shape = 's32[2]{0}', space=sflag, size = 0x8, scoped, tag = 'scoped memory for tpu_custom_call.1']
    #allocation5 [shape = 'u8[131072]{0}', space=vmem, size = 0x20000, scoped, tag = 'output window, operand 0']
    %7 = vsyncpa [#allocation3], 0
    %8 = vsyncpa [#allocation4], 0
    %s9 = scalar_lea.sflag [#allocation4], 1
    %10 = vsyncpa %s9, 0
    loop: start=0, step=1, limit=4
    $region2: #{tpu_custom_call.1} parent=1 // loop_pre_header
      _
    $region3: #{tpu_custom_call.1} parent=1 // loop_header
      %s12 = sphi 0, %s16
      %p13 = scmp.ge.s32.totalorder %s12, 4
      %s22 = sphi 0, %s24
      %s25 = sphi 0, %s22
      %s26 = sphi 0, %s25
      %s42 = sphi 0, %s26
      %s46 = sphi 0, %s46
      %s48 = sphi 0, %s46
      %s49 = sphi 0, %s48
      %s63 = sphi 0, %s49
      %s69 = sphi 0, %s71
      %s72 = sphi 0, %s69
      %s73 = sphi 0, %s72
      %s89 = sphi 0, %s73
    $region4: #{tpu_custom_call.1} parent=1 // loop_header_branch
      %15 = sbr.rel (%p13) target = $region8
    $region5: #{tpu_custom_call.1} parent=1 // loop_body
      %s17 = ssub.s32 %s12, 1
      %s18 = ssub.s32 %s12, 2
      %s19 = sadd.s32 %s12, 1
      %s20 = ssub.s32 %s12, %s19
      %p21 = scmp.eq.s32.totalorder %s20, 0
      %s23 = sadd.s32 %s22, 1
      %s24 = scalar_select %p21, %s22, %s23
      %p27 = pneg %p21
      %p28 = scmp.eq.s32.totalorder %s12, 1
      %p29 = por %p27, %p28
      %p30 = scmp.ne.s32.totalorder %s22, %s25
      %p31 = scmp.eq.s32.totalorder %s12, 0
      %p32 = por %p30, %p31
      %p33 = scmp.ne.s32.totalorder %s22, %s25
      %p34 = scmp.eq.s32.totalorder %s17, 1
      %p35 = por %p33, %p34
      %p36 = scmp.ne.s32.totalorder %s25, %s26
      %p37 = scmp.eq.s32.totalorder %s17, 0
      %p38 = por %p36, %p37
      %p39 = scmp.ne.s32.totalorder %s25, %s26
      %p40 = scmp.eq.s32.totalorder %s18, 1
      %p41 = por %p39, %p40
      %p43 = scmp.ne.s32.totalorder %s26, %s42
      %p44 = scmp.eq.s32.totalorder %s18, 0
      %p45 = por %p43, %p44
      %s47 = sadd.s32 %s46, 1
      %p50 = scmp.eq.s32.totalorder %s12, 1
      %p51 = scmp.ne.s32.totalorder %s46, %s48
      %p52 = scmp.eq.s32.totalorder %s12, 0
      %p53 = por %p51, %p52
      %p54 = scmp.ne.s32.totalorder %s46, %s48
      %p55 = scmp.eq.s32.totalorder %s17, 1
      %p56 = por %p54, %p55
      %p57 = scmp.ne.s32.totalorder %s48, %s49
      %p58 = scmp.eq.s32.totalorder %s17, 0
      %p59 = por %p57, %p58
      %p60 = scmp.ne.s32.totalorder %s48, %s49
      %p61 = scmp.eq.s32.totalorder %s18, 1
      %p62 = por %p60, %p61
      %p64 = scmp.ne.s32.totalorder %s49, %s63
      %p65 = scmp.eq.s32.totalorder %s18, 0
      %p66 = por %p64, %p65
      %s67 = ssub.s32 %s12, %s19
      %p68 = scmp.eq.s32.totalorder %s67, 0
      %s70 = sadd.s32 %s69, 1
      %s71 = scalar_select %p68, %s69, %s70
      %p74 = pneg %p68
      %p75 = scmp.eq.s32.totalorder %s12, 1
      %p76 = por %p74, %p75
      %p77 = scmp.ne.s32.totalorder %s69, %s72
      %p78 = scmp.eq.s32.totalorder %s12, 0
      %p79 = por %p77, %p78
      %p80 = scmp.ne.s32.totalorder %s69, %s72
      %p81 = scmp.eq.s32.totalorder %s17, 1
      %p82 = por %p80, %p81
      %p83 = scmp.ne.s32.totalorder %s72, %s73
      %p84 = scmp.eq.s32.totalorder %s17, 0
      %p85 = por %p83, %p84
      %p86 = scmp.ne.s32.totalorder %s72, %s73
      %p87 = scmp.eq.s32.totalorder %s18, 1
      %p88 = por %p86, %p87
      %p90 = scmp.ne.s32.totalorder %s73, %s89
      %p91 = scmp.eq.s32.totalorder %s18, 0
      %p92 = por %p90, %p91
      %p93 = scmp.le.s32.totalorder 1, %s12
      %p94 = scmp.lt.s32.totalorder %s12, 3
      %p95 = pnand %p93, %p94
      %p96 = pneg %p95
      // Predicated region
      $region9: #{tpu_custom_call.1} parent=5 // pred_check
        _
      $region10: #{tpu_custom_call.1} parent=5 // pred_check_branch
        %98 = sbr.rel (%p95) target = $region12
      $region11: #{tpu_custom_call.1} parent=5 // pred_region
        %s99 = ssub.s32 %s12, 1
        // Predicated region
        $region13: #{tpu_custom_call.1} parent=11 // pred_check
          %p100 = pneg %p59
        $region14: #{tpu_custom_call.1} parent=11 // pred_check_branch
          %102 = sbr.rel (%p100) target = $region16
        $region15: #{tpu_custom_call.1} parent=11 // pred_region
          %s104 = ssub.s32 9344, 9344
          %105 = vsyncadd [#allocation3], %s104
          %s106 = sshll.u32 [#allocation2], 4
          %s107 = int_to_ptr.vmem [resolvable:$true] %s106
          %112 = dma.hbm_to_vmem [thread:$0]  %s1, 9344, %s107, [#allocation3], 128, 128, 8
        $region16: #{tpu_custom_call.1} parent=11 // pred_fallthru
          _
      $region12: #{tpu_custom_call.1} parent=5 // pred_fallthru
        _
      %p113 = scmp.lt.s32.totalorder %s12, 2
      // Predicated region
      $region17: #{tpu_custom_call.1} parent=5 // pred_check
        %p114 = pneg %p113
      $region18: #{tpu_custom_call.1} parent=5 // pred_check_branch
        %116 = sbr.rel (%p114) target = $region20
      $region19: #{tpu_custom_call.1} parent=5 // pred_region
        // Predicated region
        $region21: #{tpu_custom_call.1} parent=19 // pred_check
          %p117 = pneg %p32
        $region22: #{tpu_custom_call.1} parent=19 // pred_check_branch
          %119 = sbr.rel (%p117) target = $region24
        $region23: #{tpu_custom_call.1} parent=19 // pred_region
          %s120 = smul.u32 16, %s12
          %p121 = scmp.lt.s32.totalorder %s120, 31
          %s122 = scalar_select %p121, %s120, 31
          %s123 = smul.addr %s122, 8
          %s124 = scalar_lea.vmem %s0, %s123
          %s125 = smul.u32 16, %s12
        $region24: #{tpu_custom_call.1} parent=19 // pred_fallthru
          _
      $region20: #{tpu_custom_call.1} parent=5 // pred_fallthru
        _
      %p126 = scmp.le.s32.totalorder 1, %s12
      %p127 = scmp.lt.s32.totalorder %s12, 3
      %p128 = pnand %p126, %p127
      %p129 = pneg %p128
      // Predicated region
      $region25: #{tpu_custom_call.1} parent=5 // pred_check
        _
      $region26: #{tpu_custom_call.1} parent=5 // pred_check_branch
        %131 = sbr.rel (%p128) target = $region28
      $region27: #{tpu_custom_call.1} parent=5 // pred_region
        %s132 = ssub.s32 %s12, 1
        // Predicated region
        $region29: #{tpu_custom_call.1} parent=27 // pred_check
          %p133 = pneg %p59
        $region30: #{tpu_custom_call.1} parent=27 // pred_check_branch
          %135 = sbr.rel (%p133) target = $region32
        $region31: #{tpu_custom_call.1} parent=27 // pred_region
          %136 = dma.done [#allocation3], 9344
        $region32: #{tpu_custom_call.1} parent=27 // pred_fallthru
          _
        %s137 = smul.u32 16, %s17
        %p138 = scmp.lt.s32.totalorder %s137, 31
        %s139 = scalar_select %p138, %s137, 31
        %s140 = smul.addr %s139, 8
        %s141 = scalar_lea.vmem %s0, %s140
        %p142 = pneg %p38
        %p143 = pneg %p35
        %p144 = pneg %p59
        %p145 = pneg %p56
        %p146 = pneg %p85
        %p147 = pneg %p82
        %s148 = sand.u32 %s72, 1
        %s149 = scalar_lea.sflag [#allocation4], %s148
        %s150 = sand.u32 %s72, 1
        %s151 = smul.addr %s150, 128
        %s152 = scalar_lea.vmem [#allocation5], %s151
        %s153 = smul.u32 16, %s17
        %p154 = scmp.lt.s32.totalorder %s153, 31
        %s155 = scalar_select %p154, %s153, 31
        %s156 = smul.addr %s155, 8
        %s157 = scalar_lea.vmem %s0, %s156
        %s158 = smul.u32 16, %s17
        %s159 = smul.u32 16, %s17
        %v161 = vld [vmem:[%s157] sm:$0xff]
        %v162 = vld [vmem:[%s157 + $0x8] sm:$0xff]
        %v163 = vld [vmem:[%s157 + $0x10] sm:$0xff]
        %v164 = vld [vmem:[%s157 + $0x18] sm:$0xff]
        %v165 = vld [vmem:[%s157 + $0x20] sm:$0xff]
        %v166 = vld [vmem:[%s157 + $0x28] sm:$0xff]
        %v167 = vld [vmem:[%s157 + $0x30] sm:$0xff]
        %v168 = vld [vmem:[%s157 + $0x38] sm:$0xff]
        %v169 = vld [vmem:[%s157 + $0x40] sm:$0xff]
        %v170 = vld [vmem:[%s157 + $0x48] sm:$0xff]
        %v171 = vld [vmem:[%s157 + $0x50] sm:$0xff]
        %v172 = vld [vmem:[%s157 + $0x58] sm:$0xff]
        %v173 = vld [vmem:[%s157 + $0x60] sm:$0xff]
        %v174 = vld [vmem:[%s157 + $0x68] sm:$0xff]
        %v175 = vld [vmem:[%s157 + $0x70] sm:$0xff]
        %v176 = vld [vmem:[%s157 + $0x78] sm:$0xff]
        %v177 = vld [vmem:[#allocation2 + $0x240] sm:$0xff]
        %v178 = vld [vmem:[#allocation2] sm:$0xff]
        %v179 = vld [vmem:[#allocation2 + $0x8] sm:$0xff]
        %v180 = vld [vmem:[#allocation2 + $0x10] sm:$0xff]
        %v181 = vld [vmem:[#allocation2 + $0x18] sm:$0xff]
        %v182 = vld [vmem:[#allocation2 + $0x20] sm:$0xff]
        %v183 = vld [vmem:[#allocation2 + $0x28] sm:$0xff]
        %v184 = vld [vmem:[#allocation2 + $0x30] sm:$0xff]
        %v185 = vld [vmem:[#allocation2 + $0x38] sm:$0xff]
        %v186 = vld [vmem:[#allocation2 + $0x40] sm:$0xff]
        %v187 = vld [vmem:[#allocation2 + $0x48] sm:$0xff]
        %v188 = vpack.c.bf16 %v162, %v161
        %v189 = vpack.c.bf16 %v164, %v163
        %v190 = vpack.c.bf16 %v166, %v165
        %v191 = vpack.c.bf16 %v168, %v167
        %v192 = vpack.c.bf16 %v170, %v169
        %v193 = vpack.c.bf16 %v172, %v171
        %v194 = vpack.c.bf16 %v174, %v173
        %v195 = vpack.c.bf16 %v176, %v175
        %v196 = vpack.c.bf16 %v179, %v178
        %v197 = vpack.c.bf16 %v181, %v180
        %v198 = vpack.c.bf16 %v183, %v182
        %v199 = vpack.c.bf16 %v185, %v184
        %v200 = vpack.c.bf16 %v187, %v186
        %v201 = vlaneseq
        %v202 = vshrl.u32 %v201, 7
        %v203 = vsub.s32 0, %v202
        %v204 = vrot.slane %v177, %v203
        %vm205 = vcmask 654336
        %v207 = vsel %vm205, %v188, 0
        %v210 = vsel %vm205, %v189, 0
        %v213 = vsel %vm205, %v190, 0
        %v216 = vsel %vm205, %v191, 0
        %v219 = vsel %vm205, %v192, 0
        %v222 = vsel %vm205, %v193, 0
        %v225 = vsel %vm205, %v194, 0
        %v228 = vsel %vm205, %v195, 0
        %230 = vmatprep.subr.bf16.mxu0 0
        %231 = vmatpush1.bf16.msra.mxu0 %v196
        %232 = vmatprep.subr.bf16.mxu0 0
        %233 = vmatpush1.bf16.msra.mxu0 %v197
        %234 = vmatprep.subr.bf16.mxu0 0
        %235 = vmatpush1.bf16.msra.mxu0 %v198
        %236 = vmatprep.subr.bf16.mxu0 0
        %237 = vmatpush1.bf16.msra.mxu0 %v199
        %238 = vmatprep.subr.bf16.mxu0 0
        %239 = vmatpush1.bf16.msra.mxu0 %v200
        %240 = vmatprep.subr.bf16.mxu0 0
        %241 = vmatpush1.bf16.msra.mxu0 0
        %242 = vmatprep.subr.bf16.mxu0 0
        %243 = vmatpush1.bf16.msra.mxu0 0
        %244 = vmatprep.subr.bf16.mxu0 0
        %245 = vmatpush1.bf16.msra.mxu0 0
        %246 = vmatprep.subr.bf16.mxu0 0
        %247 = vmatpush1.bf16.msra.mxu0 0
        %248 = vmatprep.subr.bf16.mxu0 0
        %249 = vmatpush1.bf16.msra.mxu0 0
        %250 = vmatprep.subr.bf16.mxu0 0
        %251 = vmatpush1.bf16.msra.mxu0 0
        %252 = vmatprep.subr.bf16.mxu0 0
        %253 = vmatpush1.bf16.msra.mxu0 0
        %254 = vmatprep.subr.bf16.mxu0 0
        %255 = vmatpush1.bf16.msra.mxu0 0
        %256 = vmatprep.subr.bf16.mxu0 0
        %257 = vmatpush1.bf16.msra.mxu0 0
        %258 = vmatprep.subr.bf16.mxu0 0
        %259 = vmatpush1.bf16.msra.mxu0 0
        %260 = vmatprep.subr.bf16.mxu0 0
        %261 = vmatpush1.bf16.msra.mxu0 0
        %262 = vmatprep.mubr.bf16.mxu0 0
        %263 = vmatmul.mubr.bf16.gmra.mrb[0].mxu0 %v207
        %v264 = vpop.f32.mrb[0].mxu0
        %v265 = vadd.f32 %v204, %v264
        %v266 = vpop.f32.mrb[0].mxu0
        %v267 = vpop.f32.mrb[0].mxu0
        %v268 = vadd.f32 %v204, %v267
        %v269 = vpop.f32.mrb[0].mxu0
        %270 = vmatprep.mubr.bf16.mxu0 0
        %271 = vmatmul.mubr.bf16.gmra.mrb[0].mxu0 %v210
        %v272 = vpop.f32.mrb[0].mxu0
        %v273 = vadd.f32 %v204, %v272
        %v274 = vpop.f32.mrb[0].mxu0
        %v275 = vpop.f32.mrb[0].mxu0
        %v276 = vadd.f32 %v204, %v275
        %v277 = vpop.f32.mrb[0].mxu0
        %278 = vmatprep.mubr.bf16.mxu0 0
        %279 = vmatmul.mubr.bf16.gmra.mrb[0].mxu0 %v213
        %v280 = vpop.f32.mrb[0].mxu0
        %v281 = vadd.f32 %v204, %v280
        %v282 = vpop.f32.mrb[0].mxu0
        %v283 = vpop.f32.mrb[0].mxu0
        %v284 = vadd.f32 %v204, %v283
        %v285 = vpop.f32.mrb[0].mxu0
        %286 = vmatprep.mubr.bf16.mxu0 0
        %287 = vmatmul.mubr.bf16.gmra.mrb[0].mxu0 %v216
        %v288 = vpop.f32.mrb[0].mxu0
        %v289 = vadd.f32 %v204, %v288
        %v290 = vpop.f32.mrb[0].mxu0
        %v291 = vpop.f32.mrb[0].mxu0
        %v292 = vadd.f32 %v204, %v291
        %v293 = vpop.f32.mrb[0].mxu0
        %294 = vmatprep.mubr.bf16.mxu0 0
        %295 = vmatmul.mubr.bf16.gmra.mrb[0].mxu0 %v219
        %v296 = vpop.f32.mrb[0].mxu0
        %v297 = vadd.f32 %v204, %v296
        %v298 = vpop.f32.mrb[0].mxu0
        %v299 = vpop.f32.mrb[0].mxu0
        %v300 = vadd.f32 %v204, %v299
        %v301 = vpop.f32.mrb[0].mxu0
        %302 = vmatprep.mubr.bf16.mxu0 0
        %303 = vmatmul.mubr.bf16.gmra.mrb[0].mxu0 %v222
        %v304 = vpop.f32.mrb[0].mxu0
        %v305 = vadd.f32 %v204, %v304
        %v306 = vpop.f32.mrb[0].mxu0
        %v307 = vpop.f32.mrb[0].mxu0
        %v308 = vadd.f32 %v204, %v307
        %v309 = vpop.f32.mrb[0].mxu0
        %310 = vmatprep.mubr.bf16.mxu0 0
        %311 = vmatmul.mubr.bf16.gmra.mrb[0].mxu0 %v225
        %v312 = vpop.f32.mrb[0].mxu0
        %v313 = vadd.f32 %v204, %v312
        %v314 = vpop.f32.mrb[0].mxu0
        %v315 = vpop.f32.mrb[0].mxu0
        %v316 = vadd.f32 %v204, %v315
        %v317 = vpop.f32.mrb[0].mxu0
        %318 = vmatprep.mubr.bf16.mxu0 0
        %319 = vmatmul.mubr.bf16.gmra.mrb[0].mxu0 %v228
        %v320 = vpop.f32.mrb[0].mxu0
        %v321 = vadd.f32 %v204, %v320
        %v322 = vpop.f32.mrb[0].mxu0
        %v323 = vpop.f32.mrb[0].mxu0
        %v324 = vadd.f32 %v204, %v323
        %v325 = vpop.f32.mrb[0].mxu0
        %326 = vdwg.mxu0
        %v327 = vmax.f32 %v265, 0.0
        %v328 = vmax.f32 %v268, 0.0
        %v329 = vmax.f32 %v273, 0.0
        %v330 = vmax.f32 %v276, 0.0
        %v331 = vmax.f32 %v281, 0.0
        %v332 = vmax.f32 %v284, 0.0
        %v333 = vmax.f32 %v289, 0.0
        %v334 = vmax.f32 %v292, 0.0
        %v335 = vmax.f32 %v297, 0.0
        %v336 = vmax.f32 %v300, 0.0
        %v337 = vmax.f32 %v305, 0.0
        %v338 = vmax.f32 %v308, 0.0
        %v339 = vmax.f32 %v313, 0.0
        %v340 = vmax.f32 %v316, 0.0
        %v341 = vmax.f32 %v321, 0.0
        %v342 = vmax.f32 %v324, 0.0
        %v343 = vld [vmem:[#allocation2 + $0xa0] sm:$0xff]
        %v344 = vld [vmem:[#allocation2 + $0xa8] sm:$0xff]
        %v345 = vld [vmem:[#allocation2 + $0xb0] sm:$0xff]
        %v346 = vld [vmem:[#allocation2 + $0xb8] sm:$0xff]
        %v347 = vld [vmem:[#allocation2 + $0xc0] sm:$0xff]
        %v348 = vld [vmem:[#allocation2 + $0xc8] sm:$0xff]
        %v349 = vld [vmem:[#allocation2 + $0xd0] sm:$0xff]
        %v350 = vld [vmem:[#allocation2 + $0xd8] sm:$0xff]
        %v351 = vpack.c.bf16 %v328, %v327
        %v352 = vpack.c.bf16 %v330, %v329
        %v353 = vpack.c.bf16 %v332, %v331
        %v354 = vpack.c.bf16 %v334, %v333
        %v355 = vpack.c.bf16 %v336, %v335
        %v356 = vpack.c.bf16 %v338, %v337
        %v357 = vpack.c.bf16 %v340, %v339
        %v358 = vpack.c.bf16 %v342, %v341
        %v359 = vpack.c.bf16 %v344, %v343
        %v360 = vpack.c.bf16 %v346, %v345
        %v361 = vpack.c.bf16 %v348, %v347
        %v362 = vpack.c.bf16 %v350, %v349
        %v363 = vlaneseq
        %v364 = vshrl.u32 %v363, 7
        %v365 = vsub.s32 2, %v364
        %v366 = vrot.slane %v177, %v365
        %vm367 = vcmask 523264
        %v369 = vsel %vm367, %v351, 0
        %v372 = vsel %vm367, %v352, 0
        %v375 = vsel %vm367, %v353, 0
        %v378 = vsel %vm367, %v354, 0
        %v381 = vsel %vm367, %v355, 0
        %v384 = vsel %vm367, %v356, 0
        %v387 = vsel %vm367, %v357, 0
        %v390 = vsel %vm367, %v358, 0
        %392 = vmatprep.subr.bf16.mxu0 0
        %393 = vmatpush1.bf16.msra.mxu0 %v359
        %394 = vmatprep.subr.bf16.mxu0 0
        %395 = vmatpush1.bf16.msra.mxu0 %v360
        %396 = vmatprep.subr.bf16.mxu0 0
        %397 = vmatpush1.bf16.msra.mxu0 %v361
        %398 = vmatprep.subr.bf16.mxu0 0
        %399 = vmatpush1.bf16.msra.mxu0 %v362
        %400 = vmatprep.subr.bf16.mxu0 0
        %401 = vmatpush1.bf16.msra.mxu0 0
        %402 = vmatprep.subr.bf16.mxu0 0
        %403 = vmatpush1.bf16.msra.mxu0 0
        %404 = vmatprep.subr.bf16.mxu0 0
        %405 = vmatpush1.bf16.msra.mxu0 0
        %406 = vmatprep.subr.bf16.mxu0 0
        %407 = vmatpush1.bf16.msra.mxu0 0
        %408 = vmatprep.subr.bf16.mxu0 0
        %409 = vmatpush1.bf16.msra.mxu0 0
        %410 = vmatprep.subr.bf16.mxu0 0
        %411 = vmatpush1.bf16.msra.mxu0 0
        %412 = vmatprep.subr.bf16.mxu0 0
        %413 = vmatpush1.bf16.msra.mxu0 0
        %414 = vmatprep.subr.bf16.mxu0 0
        %415 = vmatpush1.bf16.msra.mxu0 0
        %416 = vmatprep.subr.bf16.mxu0 0
        %417 = vmatpush1.bf16.msra.mxu0 0
        %418 = vmatprep.subr.bf16.mxu0 0
        %419 = vmatpush1.bf16.msra.mxu0 0
        %420 = vmatprep.subr.bf16.mxu0 0
        %421 = vmatpush1.bf16.msra.mxu0 0
        %422 = vmatprep.subr.bf16.mxu0 0
        %423 = vmatpush1.bf16.msra.mxu0 0
        %424 = vmatprep.mubr.bf16.mxu0 0
        %425 = vmatmul.mubr.bf16.gmra.mrb[0].mxu0 %v369
        %v426 = vpop.f32.mrb[0].mxu0
        %v427 = vadd.f32 %v366, %v426
        %v428 = vpop.f32.mrb[0].mxu0
        %v429 = vpop.f32.mrb[0].mxu0
        %v430 = vadd.f32 %v366, %v429
        %v431 = vpop.f32.mrb[0].mxu0
        %432 = vmatprep.mubr.bf16.mxu0 0
        %433 = vmatmul.mubr.bf16.gmra.mrb[0].mxu0 %v372
        %v434 = vpop.f32.mrb[0].mxu0
        %v435 = vadd.f32 %v366, %v434
        %v436 = vpop.f32.mrb[0].mxu0
        %v437 = vpop.f32.mrb[0].mxu0
        %v438 = vadd.f32 %v366, %v437
        %v439 = vpop.f32.mrb[0].mxu0
        %440 = vmatprep.mubr.bf16.mxu0 0
        %441 = vmatmul.mubr.bf16.gmra.mrb[0].mxu0 %v375
        %v442 = vpop.f32.mrb[0].mxu0
        %v443 = vadd.f32 %v366, %v442
        %v444 = vpop.f32.mrb[0].mxu0
        %v445 = vpop.f32.mrb[0].mxu0
        %v446 = vadd.f32 %v366, %v445
        %v447 = vpop.f32.mrb[0].mxu0
        %448 = vmatprep.mubr.bf16.mxu0 0
        %449 = vmatmul.mubr.bf16.gmra.mrb[0].mxu0 %v378
        %v450 = vpop.f32.mrb[0].mxu0
        %v451 = vadd.f32 %v366, %v450
        %v452 = vpop.f32.mrb[0].mxu0
        %v453 = vpop.f32.mrb[0].mxu0
        %v454 = vadd.f32 %v366, %v453
        %v455 = vpop.f32.mrb[0].mxu0
        %456 = vmatprep.mubr.bf16.mxu0 0
        %457 = vmatmul.mubr.bf16.gmra.mrb[0].mxu0 %v381
        %v458 = vpop.f32.mrb[0].mxu0
        %v459 = vadd.f32 %v366, %v458
        %v460 = vpop.f32.mrb[0].mxu0
        %v461 = vpop.f32.mrb[0].mxu0
        %v462 = vadd.f32 %v366, %v461
        %v463 = vpop.f32.mrb[0].mxu0
        %464 = vmatprep.mubr.bf16.mxu0 0
        %465 = vmatmul.mubr.bf16.gmra.mrb[0].mxu0 %v384
        %v466 = vpop.f32.mrb[0].mxu0
        %v467 = vadd.f32 %v366, %v466
        %v468 = vpop.f32.mrb[0].mxu0
        %v469 = vpop.f32.mrb[0].mxu0
        %v470 = vadd.f32 %v366, %v469
        %v471 = vpop.f32.mrb[0].mxu0
        %472 = vmatprep.mubr.bf16.mxu0 0
        %473 = vmatmul.mubr.bf16.gmra.mrb[0].mxu0 %v387
        %v474 = vpop.f32.mrb[0].mxu0
        %v475 = vadd.f32 %v366, %v474
        %v476 = vpop.f32.mrb[0].mxu0
        %v477 = vpop.f32.mrb[0].mxu0
        %v478 = vadd.f32 %v366, %v477
        %v479 = vpop.f32.mrb[0].mxu0
        %480 = vmatprep.mubr.bf16.mxu0 0
        %481 = vmatmul.mubr.bf16.gmra.mrb[0].mxu0 %v390
        %v482 = vpop.f32.mrb[0].mxu0
        %v483 = vadd.f32 %v366, %v482
        %v484 = vpop.f32.mrb[0].mxu0
        %v485 = vpop.f32.mrb[0].mxu0
        %v486 = vadd.f32 %v366, %v485
        %v487 = vpop.f32.mrb[0].mxu0
        %488 = vdwg.mxu0
        %v489 = vmax.f32 %v427, 0.0
        %v490 = vmax.f32 %v430, 0.0
        %v491 = vmax.f32 %v435, 0.0
        %v492 = vmax.f32 %v438, 0.0
        %v493 = vmax.f32 %v443, 0.0
        %v494 = vmax.f32 %v446, 0.0
        %v495 = vmax.f32 %v451, 0.0
        %v496 = vmax.f32 %v454, 0.0
        %v497 = vmax.f32 %v459, 0.0
        %v498 = vmax.f32 %v462, 0.0
        %v499 = vmax.f32 %v467, 0.0
        %v500 = vmax.f32 %v470, 0.0
        %v501 = vmax.f32 %v475, 0.0
        %v502 = vmax.f32 %v478, 0.0
        %v503 = vmax.f32 %v483, 0.0
        %v504 = vmax.f32 %v486, 0.0
        %v505 = vld [vmem:[#allocation2 + $0x50] sm:$0xff]
        %v506 = vld [vmem:[#allocation2 + $0x58] sm:$0xff]
        %v507 = vld [vmem:[#allocation2 + $0x60] sm:$0xff]
        %v508 = vld [vmem:[#allocation2 + $0x68] sm:$0xff]
        %v509 = vld [vmem:[#allocation2 + $0x70] sm:$0xff]
        %v510 = vld [vmem:[#allocation2 + $0x78] sm:$0xff]
        %v511 = vld [vmem:[#allocation2 + $0x80] sm:$0xff]
        %v512 = vld [vmem:[#allocation2 + $0x88] sm:$0xff]
        %v513 = vld [vmem:[#allocation2 + $0x90] sm:$0xff]
        %v514 = vld [vmem:[#allocation2 + $0x98] sm:$0xff]
        %v515 = vpack.c.bf16 %v506, %v505
        %v516 = vpack.c.bf16 %v508, %v507
        %v517 = vpack.c.bf16 %v510, %v509
        %v518 = vpack.c.bf16 %v512, %v511
        %v519 = vpack.c.bf16 %v514, %v513
        %v520 = vlaneseq
        %v521 = vshrl.u32 %v520, 7
        %v522 = vsub.s32 1, %v521
        %v523 = vrot.slane %v177, %v522
        %524 = vmatprep.subr.bf16.mxu0 0
        %525 = vmatpush1.bf16.msra.mxu0 %v515
        %526 = vmatprep.subr.bf16.mxu0 0
        %527 = vmatpush1.bf16.msra.mxu0 %v516
        %528 = vmatprep.subr.bf16.mxu0 0
        %529 = vmatpush1.bf16.msra.mxu0 %v517
        %530 = vmatprep.subr.bf16.mxu0 0
        %531 = vmatpush1.bf16.msra.mxu0 %v518
        %532 = vmatprep.subr.bf16.mxu0 0
        %533 = vmatpush1.bf16.msra.mxu0 %v519
        %534 = vmatprep.subr.bf16.mxu0 0
        %535 = vmatpush1.bf16.msra.mxu0 0
        %536 = vmatprep.subr.bf16.mxu0 0
        %537 = vmatpush1.bf16.msra.mxu0 0
        %538 = vmatprep.subr.bf16.mxu0 0
        %539 = vmatpush1.bf16.msra.mxu0 0
        %540 = vmatprep.subr.bf16.mxu0 0
        %541 = vmatpush1.bf16.msra.mxu0 0
        %542 = vmatprep.subr.bf16.mxu0 0
        %543 = vmatpush1.bf16.msra.mxu0 0
        %544 = vmatprep.subr.bf16.mxu0 0
        %545 = vmatpush1.bf16.msra.mxu0 0
        %546 = vmatprep.subr.bf16.mxu0 0
        %547 = vmatpush1.bf16.msra.mxu0 0
        %548 = vmatprep.subr.bf16.mxu0 0
        %549 = vmatpush1.bf16.msra.mxu0 0
        %550 = vmatprep.subr.bf16.mxu0 0
        %551 = vmatpush1.bf16.msra.mxu0 0
        %552 = vmatprep.subr.bf16.mxu0 0
        %553 = vmatpush1.bf16.msra.mxu0 0
        %554 = vmatprep.subr.bf16.mxu0 0
        %555 = vmatpush1.bf16.msra.mxu0 0
        %556 = vmatprep.mubr.bf16.mxu0 0
        %557 = vmatmul.mubr.bf16.gmra.mrb[0].mxu0 %v207
        %v558 = vpop.f32.mrb[0].mxu0
        %v559 = vadd.f32 %v523, %v558
        %v560 = vpop.f32.mrb[0].mxu0
        %v561 = vpop.f32.mrb[0].mxu0
        %v562 = vadd.f32 %v523, %v561
        %v563 = vpop.f32.mrb[0].mxu0
        %564 = vmatprep.mubr.bf16.mxu0 0
        %565 = vmatmul.mubr.bf16.gmra.mrb[0].mxu0 %v210
        %v566 = vpop.f32.mrb[0].mxu0
        %v567 = vadd.f32 %v523, %v566
        %v568 = vpop.f32.mrb[0].mxu0
        %v569 = vpop.f32.mrb[0].mxu0
        %v570 = vadd.f32 %v523, %v569
        %v571 = vpop.f32.mrb[0].mxu0
        %572 = vmatprep.mubr.bf16.mxu0 0
        %573 = vmatmul.mubr.bf16.gmra.mrb[0].mxu0 %v213
        %v574 = vpop.f32.mrb[0].mxu0
        %v575 = vadd.f32 %v523, %v574
        %v576 = vpop.f32.mrb[0].mxu0
        %v577 = vpop.f32.mrb[0].mxu0
        %v578 = vadd.f32 %v523, %v577
        %v579 = vpop.f32.mrb[0].mxu0
        %580 = vmatprep.mubr.bf16.mxu0 0
        %581 = vmatmul.mubr.bf16.gmra.mrb[0].mxu0 %v216
        %v582 = vpop.f32.mrb[0].mxu0
        %v583 = vadd.f32 %v523, %v582
        %v584 = vpop.f32.mrb[0].mxu0
        %v585 = vpop.f32.mrb[0].mxu0
        %v586 = vadd.f32 %v523, %v585
        %v587 = vpop.f32.mrb[0].mxu0
        %588 = vmatprep.mubr.bf16.mxu0 0
        %589 = vmatmul.mubr.bf16.gmra.mrb[0].mxu0 %v219
        %v590 = vpop.f32.mrb[0].mxu0
        %v591 = vadd.f32 %v523, %v590
        %v592 = vpop.f32.mrb[0].mxu0
        %v593 = vpop.f32.mrb[0].mxu0
        %v594 = vadd.f32 %v523, %v593
        %v595 = vpop.f32.mrb[0].mxu0
        %596 = vmatprep.mubr.bf16.mxu0 0
        %597 = vmatmul.mubr.bf16.gmra.mrb[0].mxu0 %v222
        %v598 = vpop.f32.mrb[0].mxu0
        %v599 = vadd.f32 %v523, %v598
        %v600 = vpop.f32.mrb[0].mxu0
        %v601 = vpop.f32.mrb[0].mxu0
        %v602 = vadd.f32 %v523, %v601
        %v603 = vpop.f32.mrb[0].mxu0
        %604 = vmatprep.mubr.bf16.mxu0 0
        %605 = vmatmul.mubr.bf16.gmra.mrb[0].mxu0 %v225
        %v606 = vpop.f32.mrb[0].mxu0
        %v607 = vadd.f32 %v523, %v606
        %v608 = vpop.f32.mrb[0].mxu0
        %v609 = vpop.f32.mrb[0].mxu0
        %v610 = vadd.f32 %v523, %v609
        %v611 = vpop.f32.mrb[0].mxu0
        %612 = vmatprep.mubr.bf16.mxu0 0
        %613 = vmatmul.mubr.bf16.gmra.mrb[0].mxu0 %v228
        %v614 = vpop.f32.mrb[0].mxu0
        %v615 = vadd.f32 %v523, %v614
        %v616 = vpop.f32.mrb[0].mxu0
        %v617 = vpop.f32.mrb[0].mxu0
        %v618 = vadd.f32 %v523, %v617
        %v619 = vpop.f32.mrb[0].mxu0
        %620 = vdwg.mxu0
        %v621 = vmax.f32 %v559, 0.0
        %v622 = vmax.f32 %v562, 0.0
        %v623 = vmax.f32 %v567, 0.0
        %v624 = vmax.f32 %v570, 0.0
        %v625 = vmax.f32 %v575, 0.0
        %v626 = vmax.f32 %v578, 0.0
        %v627 = vmax.f32 %v583, 0.0
        %v628 = vmax.f32 %v586, 0.0
        %v629 = vmax.f32 %v591, 0.0
        %v630 = vmax.f32 %v594, 0.0
        %v631 = vmax.f32 %v599, 0.0
        %v632 = vmax.f32 %v602, 0.0
        %v633 = vmax.f32 %v607, 0.0
        %v634 = vmax.f32 %v610, 0.0
        %v635 = vmax.f32 %v615, 0.0
        %v636 = vmax.f32 %v618, 0.0
        %v637 = vld [vmem:[#allocation2 + $0xe0] sm:$0xff]
        %v638 = vld [vmem:[#allocation2 + $0xe8] sm:$0xff]
        %v639 = vld [vmem:[#allocation2 + $0xf0] sm:$0xff]
        %v640 = vld [vmem:[#allocation2 + $0xf8] sm:$0xff]
        %v641 = vld [vmem:[#allocation2 + $0x100] sm:$0xff]
        %v642 = vld [vmem:[#allocation2 + $0x108] sm:$0xff]
        %v643 = vld [vmem:[#allocation2 + $0x110] sm:$0xff]
        %v644 = vld [vmem:[#allocation2 + $0x118] sm:$0xff]
        %v645 = vpack.c.bf16 %v622, %v621
        %v646 = vpack.c.bf16 %v624, %v623
        %v647 = vpack.c.bf16 %v626, %v625
        %v648 = vpack.c.bf16 %v628, %v627
        %v649 = vpack.c.bf16 %v630, %v629
        %v650 = vpack.c.bf16 %v632, %v631
        %v651 = vpack.c.bf16 %v634, %v633
        %v652 = vpack.c.bf16 %v636, %v635
        %v653 = vpack.c.bf16 %v638, %v637
        %v654 = vpack.c.bf16 %v640, %v639
        %v655 = vpack.c.bf16 %v642, %v641
        %v656 = vpack.c.bf16 %v644, %v643
        %v657 = vlaneseq
        %v658 = vshrl.u32 %v657, 7
        %v659 = vsub.s32 3, %v658
        %v660 = vrot.slane %v177, %v659
        %v662 = vsel %vm367, %v645, 0
        %v665 = vsel %vm367, %v646, 0
        %v668 = vsel %vm367, %v647, 0
        %v671 = vsel %vm367, %v648, 0
        %v674 = vsel %vm367, %v649, 0
        %v677 = vsel %vm367, %v650, 0
        %v680 = vsel %vm367, %v651, 0
        %v683 = vsel %vm367, %v652, 0
        %685 = vmatprep.subr.bf16.mxu0 0
        %686 = vmatpush1.bf16.msra.mxu0 %v653
        %687 = vmatprep.subr.bf16.mxu0 0
        %688 = vmatpush1.bf16.msra.mxu0 %v654
        %689 = vmatprep.subr.bf16.mxu0 0
        %690 = vmatpush1.bf16.msra.mxu0 %v655
        %691 = vmatprep.subr.bf16.mxu0 0
        %692 = vmatpush1.bf16.msra.mxu0 %v656
        %693 = vmatprep.subr.bf16.mxu0 0
        %694 = vmatpush1.bf16.msra.mxu0 0
        %695 = vmatprep.subr.bf16.mxu0 0
        %696 = vmatpush1.bf16.msra.mxu0 0
        %697 = vmatprep.subr.bf16.mxu0 0
        %698 = vmatpush1.bf16.msra.mxu0 0
        %699 = vmatprep.subr.bf16.mxu0 0
        %700 = vmatpush1.bf16.msra.mxu0 0
        %701 = vmatprep.subr.bf16.mxu0 0
        %702 = vmatpush1.bf16.msra.mxu0 0
        %703 = vmatprep.subr.bf16.mxu0 0
        %704 = vmatpush1.bf16.msra.mxu0 0
        %705 = vmatprep.subr.bf16.mxu0 0
        %706 = vmatpush1.bf16.msra.mxu0 0
        %707 = vmatprep.subr.bf16.mxu0 0
        %708 = vmatpush1.bf16.msra.mxu0 0
        %709 = vmatprep.subr.bf16.mxu0 0
        %710 = vmatpush1.bf16.msra.mxu0 0
        %711 = vmatprep.subr.bf16.mxu0 0
        %712 = vmatpush1.bf16.msra.mxu0 0
        %713 = vmatprep.subr.bf16.mxu0 0
        %714 = vmatpush1.bf16.msra.mxu0 0
        %715 = vmatprep.subr.bf16.mxu0 0
        %716 = vmatpush1.bf16.msra.mxu0 0
        %717 = vmatprep.mubr.bf16.mxu0 0
        %718 = vmatmul.mubr.bf16.gmra.mrb[0].mxu0 %v662
        %v719 = vpop.f32.mrb[0].mxu0
        %v720 = vadd.f32 %v660, %v719
        %v721 = vpop.f32.mrb[0].mxu0
        %v722 = vpop.f32.mrb[0].mxu0
        %v723 = vadd.f32 %v660, %v722
        %v724 = vpop.f32.mrb[0].mxu0
        %725 = vmatprep.mubr.bf16.mxu0 0
        %726 = vmatmul.mubr.bf16.gmra.mrb[0].mxu0 %v665
        %v727 = vpop.f32.mrb[0].mxu0
        %v728 = vadd.f32 %v660, %v727
        %v729 = vpop.f32.mrb[0].mxu0
        %v730 = vpop.f32.mrb[0].mxu0
        %v731 = vadd.f32 %v660, %v730
        %v732 = vpop.f32.mrb[0].mxu0
        %733 = vmatprep.mubr.bf16.mxu0 0
        %734 = vmatmul.mubr.bf16.gmra.mrb[0].mxu0 %v668
        %v735 = vpop.f32.mrb[0].mxu0
        %v736 = vadd.f32 %v660, %v735
        %v737 = vpop.f32.mrb[0].mxu0
        %v738 = vpop.f32.mrb[0].mxu0
        %v739 = vadd.f32 %v660, %v738
        %v740 = vpop.f32.mrb[0].mxu0
        %741 = vmatprep.mubr.bf16.mxu0 0
        %742 = vmatmul.mubr.bf16.gmra.mrb[0].mxu0 %v671
        %v743 = vpop.f32.mrb[0].mxu0
        %v744 = vadd.f32 %v660, %v743
        %v745 = vpop.f32.mrb[0].mxu0
        %v746 = vpop.f32.mrb[0].mxu0
        %v747 = vadd.f32 %v660, %v746
        %v748 = vpop.f32.mrb[0].mxu0
        %749 = vmatprep.mubr.bf16.mxu0 0
        %750 = vmatmul.mubr.bf16.gmra.mrb[0].mxu0 %v674
        %v751 = vpop.f32.mrb[0].mxu0
        %v752 = vadd.f32 %v660, %v751
        %v753 = vpop.f32.mrb[0].mxu0
        %v754 = vpop.f32.mrb[0].mxu0
        %v755 = vadd.f32 %v660, %v754
        %v756 = vpop.f32.mrb[0].mxu0
        %757 = vmatprep.mubr.bf16.mxu0 0
        %758 = vmatmul.mubr.bf16.gmra.mrb[0].mxu0 %v677
        %v759 = vpop.f32.mrb[0].mxu0
        %v760 = vadd.f32 %v660, %v759
        %v761 = vpop.f32.mrb[0].mxu0
        %v762 = vpop.f32.mrb[0].mxu0
        %v763 = vadd.f32 %v660, %v762
        %v764 = vpop.f32.mrb[0].mxu0
        %765 = vmatprep.mubr.bf16.mxu0 0
        %766 = vmatmul.mubr.bf16.gmra.mrb[0].mxu0 %v680
        %v767 = vpop.f32.mrb[0].mxu0
        %v768 = vadd.f32 %v660, %v767
        %v769 = vpop.f32.mrb[0].mxu0
        %v770 = vpop.f32.mrb[0].mxu0
        %v771 = vadd.f32 %v660, %v770
        %v772 = vpop.f32.mrb[0].mxu0
        %773 = vmatprep.mubr.bf16.mxu0 0
        %774 = vmatmul.mubr.bf16.gmra.mrb[0].mxu0 %v683
        %v775 = vpop.f32.mrb[0].mxu0
        %v776 = vadd.f32 %v660, %v775
        %v777 = vpop.f32.mrb[0].mxu0
        %v778 = vpop.f32.mrb[0].mxu0
        %v779 = vadd.f32 %v660, %v778
        %v780 = vpop.f32.mrb[0].mxu0
        %781 = vdwg.mxu0
        %vm782 = vcmask 588800
        %v783 = vsel %vm782, %v720, -inf
        %784 = vmax.xlane.f32.xlu0 %v783
        %v785 = vpop.xlane.xlu0 %784
        %v786 = vsel %vm782, %v723, -inf
        %787 = vmax.xlane.f32.xlu0 %v786
        %v788 = vpop.xlane.xlu0 %787
        %v789 = vsel %vm782, %v728, -inf
        %790 = vmax.xlane.f32.xlu0 %v789
        %v791 = vpop.xlane.xlu0 %790
        %v792 = vsel %vm782, %v731, -inf
        %793 = vmax.xlane.f32.xlu0 %v792
        %v794 = vpop.xlane.xlu0 %793
        %v795 = vsel %vm782, %v736, -inf
        %796 = vmax.xlane.f32.xlu0 %v795
        %v797 = vpop.xlane.xlu0 %796
        %v798 = vsel %vm782, %v739, -inf
        %799 = vmax.xlane.f32.xlu0 %v798
        %v800 = vpop.xlane.xlu0 %799
        %v801 = vsel %vm782, %v744, -inf
        %802 = vmax.xlane.f32.xlu0 %v801
        %v803 = vpop.xlane.xlu0 %802
        %v804 = vsel %vm782, %v747, -inf
        %805 = vmax.xlane.f32.xlu0 %v804
        %v806 = vpop.xlane.xlu0 %805
        %v807 = vsel %vm782, %v752, -inf
        %808 = vmax.xlane.f32.xlu0 %v807
        %v809 = vpop.xlane.xlu0 %808
        %v810 = vsel %vm782, %v755, -inf
        %811 = vmax.xlane.f32.xlu0 %v810
        %v812 = vpop.xlane.xlu0 %811
        %v813 = vsel %vm782, %v760, -inf
        %814 = vmax.xlane.f32.xlu0 %v813
        %v815 = vpop.xlane.xlu0 %814
        %v816 = vsel %vm782, %v763, -inf
        %817 = vmax.xlane.f32.xlu0 %v816
        %v818 = vpop.xlane.xlu0 %817
        %v819 = vsel %vm782, %v768, -inf
        %820 = vmax.xlane.f32.xlu0 %v819
        %v821 = vpop.xlane.xlu0 %820
        %v822 = vsel %vm782, %v771, -inf
        %823 = vmax.xlane.f32.xlu0 %v822
        %v824 = vpop.xlane.xlu0 %823
        %v825 = vsel %vm782, %v776, -inf
        %826 = vmax.xlane.f32.xlu0 %v825
        %v827 = vpop.xlane.xlu0 %826
        %v828 = vsel %vm782, %v779, -inf
        %829 = vmax.xlane.f32.xlu0 %v828
        %v830 = vpop.xlane.xlu0 %829
        %v831 = vsub.f32 %v720, %v785
        %v832 = vsub.f32 %v723, %v788
        %v833 = vsub.f32 %v728, %v791
        %v834 = vsub.f32 %v731, %v794
        %v835 = vsub.f32 %v736, %v797
        %v836 = vsub.f32 %v739, %v800
        %v837 = vsub.f32 %v744, %v803
        %v838 = vsub.f32 %v747, %v806
        %v839 = vsub.f32 %v752, %v809
        %v840 = vsub.f32 %v755, %v812
        %v841 = vsub.f32 %v760, %v815
        %v842 = vsub.f32 %v763, %v818
        %v843 = vsub.f32 %v768, %v821
        %v844 = vsub.f32 %v771, %v824
        %v845 = vsub.f32 %v776, %v827
        %v846 = vsub.f32 %v779, %v830
        %v847 = vmul.f32 %v831, 1.442695
        %v848 = vpow.pop %v847
        %v849 = vmul.f32 %v832, 1.442695
        %v850 = vpow.pop %v849
        %v851 = vmul.f32 %v833, 1.442695
        %v852 = vpow.pop %v851
        %v853 = vmul.f32 %v834, 1.442695
        %v854 = vpow.pop %v853
        %v855 = vmul.f32 %v835, 1.442695
        %v856 = vpow.pop %v855
        %v857 = vmul.f32 %v836, 1.442695
        %v858 = vpow.pop %v857
        %v859 = vmul.f32 %v837, 1.442695
        %v860 = vpow.pop %v859
        %v861 = vmul.f32 %v838, 1.442695
        %v862 = vpow.pop %v861
        %v863 = vmul.f32 %v839, 1.442695
        %v864 = vpow.pop %v863
        %v865 = vmul.f32 %v840, 1.442695
        %v866 = vpow.pop %v865
        %v867 = vmul.f32 %v841, 1.442695
        %v868 = vpow.pop %v867
        %v869 = vmul.f32 %v842, 1.442695
        %v870 = vpow.pop %v869
        %v871 = vmul.f32 %v843, 1.442695
        %v872 = vpow.pop %v871
        %v873 = vmul.f32 %v844, 1.442695
        %v874 = vpow.pop %v873
        %v875 = vmul.f32 %v845, 1.442695
        %v876 = vpow.pop %v875
        %v877 = vmul.f32 %v846, 1.442695
        %v878 = vpow.pop %v877
        %v879 = vld [vmem:[#allocation2 + $0x120] sm:$0xff]
        %v880 = vld [vmem:[#allocation2 + $0x128] sm:$0xff]
        %v881 = vld [vmem:[#allocation2 + $0x130] sm:$0xff]
        %v882 = vld [vmem:[#allocation2 + $0x138] sm:$0xff]
        %v883 = vld [vmem:[#allocation2 + $0x140] sm:$0xff]
        %v884 = vld [vmem:[#allocation2 + $0x148] sm:$0xff]
        %v885 = vld [vmem:[#allocation2 + $0x150] sm:$0xff]
        %v886 = vld [vmem:[#allocation2 + $0x158] sm:$0xff]
        %v887 = vld [vmem:[#allocation2 + $0x160] sm:$0xff]
        %v889 = vsel %vm782, %v848, 0
        %v892 = vsel %vm782, %v850, 0
        %v895 = vsel %vm782, %v852, 0
        %v898 = vsel %vm782, %v854, 0
        %v901 = vsel %vm782, %v856, 0
        %v904 = vsel %vm782, %v858, 0
        %v907 = vsel %vm782, %v860, 0
        %v910 = vsel %vm782, %v862, 0
        %v913 = vsel %vm782, %v864, 0
        %v916 = vsel %vm782, %v866, 0
        %v919 = vsel %vm782, %v868, 0
        %v922 = vsel %vm782, %v870, 0
        %v925 = vsel %vm782, %v872, 0
        %v928 = vsel %vm782, %v874, 0
        %v931 = vsel %vm782, %v876, 0
        %v934 = vsel %vm782, %v878, 0
        %936 = vmatprep.subr.mxu0 0.0
        %937 = vmatpush1.msra.mxu0 %v879
        %938 = vmatprep.subr.mxu0 0.0
        %939 = vmatpush1.msra.mxu0 %v880
        %940 = vmatprep.subr.mxu0 0.0
        %941 = vmatpush1.msra.mxu0 %v881
        %942 = vmatprep.subr.mxu0 0.0
        %943 = vmatpush1.msra.mxu0 %v882
        %944 = vmatprep.subr.mxu0 0.0
        %945 = vmatpush1.msra.mxu0 %v883
        %946 = vmatprep.subr.mxu0 0.0
        %947 = vmatpush1.msra.mxu0 %v884
        %948 = vmatprep.subr.mxu0 0.0
        %949 = vmatpush1.msra.mxu0 %v885
        %950 = vmatprep.subr.mxu0 0.0
        %951 = vmatpush1.msra.mxu0 %v886
        %952 = vmatprep.subr.mxu0 0.0
        %953 = vmatpush1.msra.mxu0 %v887
        %954 = vmatprep.subr.mxu0 0.0
        %955 = vmatpush1.msra.mxu0 0.0
        %956 = vmatprep.subr.mxu0 0.0
        %957 = vmatpush1.msra.mxu0 0.0
        %958 = vmatprep.subr.mxu0 0.0
        %959 = vmatpush1.msra.mxu0 0.0
        %960 = vmatprep.subr.mxu0 0.0
        %961 = vmatpush1.msra.mxu0 0.0
        %962 = vmatprep.subr.mxu0 0.0
        %963 = vmatpush1.msra.mxu0 0.0
        %964 = vmatprep.subr.mxu0 0.0
        %965 = vmatpush1.msra.mxu0 0.0
        %966 = vmatprep.subr.mxu0 0.0
        %967 = vmatpush1.msra.mxu0 0.0
        %968 = vmatprep.subr.mxu0 0.0
        %969 = vmatpush1.msra.mxu0 0.0
        %970 = vmatprep.subr.mxu0 0.0
        %971 = vmatpush1.msra.mxu0 0.0
        %972 = vmatprep.subr.mxu0 0.0
        %973 = vmatpush1.msra.mxu0 0.0
        %974 = vmatprep.subr.mxu0 0.0
        %975 = vmatpush1.msra.mxu0 0.0
        %976 = vmatprep.subr.mxu0 0.0
        %977 = vmatpush1.msra.mxu0 0.0
        %978 = vmatprep.subr.mxu0 0.0
        %979 = vmatpush1.msra.mxu0 0.0
        %980 = vmatprep.subr.mxu0 0.0
        %981 = vmatpush1.msra.mxu0 0.0
        %982 = vmatprep.subr.mxu0 0.0
        %983 = vmatpush1.msra.mxu0 0.0
        %984 = vmatprep.subr.mxu0 0.0
        %985 = vmatpush1.msra.mxu0 0.0
        %986 = vmatprep.subr.mxu0 0.0
        %987 = vmatpush1.msra.mxu0 0.0
        %988 = vmatprep.subr.mxu0 0.0
        %989 = vmatpush1.msra.mxu0 0.0
        %990 = vmatprep.subr.mxu0 0.0
        %991 = vmatpush1.msra.mxu0 0.0
        %992 = vmatprep.subr.mxu0 0.0
        %993 = vmatpush1.msra.mxu0 0.0
        %994 = vmatprep.subr.mxu0 0.0
        %995 = vmatpush1.msra.mxu0 0.0
        %996 = vmatprep.subr.mxu0 0.0
        %997 = vmatpush1.msra.mxu0 0.0
        %998 = vmatprep.subr.mxu0 0.0
        %999 = vmatpush1.msra.mxu0 0.0
        %1000 = vmatprep.mubr.f32.mxu0 0.0
        %1001 = vmatmul.mubr.f32.gmra.mrb[0].mxu0 %v889
        %v1002 = vpop.f32.mrb[0].mxu0
        %v1003 = vadd.f32 0.0, %v1002
        %v1004 = vpop.f32.mrb[0].mxu0
        %1005 = vmatprep.mubr.f32.mxu0 0.0
        %1006 = vmatmul.mubr.f32.gmra.mrb[0].mxu0 %v892
        %v1007 = vpop.f32.mrb[0].mxu0
        %v1008 = vadd.f32 0.0, %v1007
        %v1009 = vpop.f32.mrb[0].mxu0
        %1010 = vmatprep.mubr.f32.mxu0 0.0
        %1011 = vmatmul.mubr.f32.gmra.mrb[0].mxu0 %v895
        %v1012 = vpop.f32.mrb[0].mxu0
        %v1013 = vadd.f32 0.0, %v1012
        %v1014 = vpop.f32.mrb[0].mxu0
        %1015 = vmatprep.mubr.f32.mxu0 0.0
        %1016 = vmatmul.mubr.f32.gmra.mrb[0].mxu0 %v898
        %v1017 = vpop.f32.mrb[0].mxu0
        %v1018 = vadd.f32 0.0, %v1017
        %v1019 = vpop.f32.mrb[0].mxu0
        %1020 = vmatprep.mubr.f32.mxu0 0.0
        %1021 = vmatmul.mubr.f32.gmra.mrb[0].mxu0 %v901
        %v1022 = vpop.f32.mrb[0].mxu0
        %v1023 = vadd.f32 0.0, %v1022
        %v1024 = vpop.f32.mrb[0].mxu0
        %1025 = vmatprep.mubr.f32.mxu0 0.0
        %1026 = vmatmul.mubr.f32.gmra.mrb[0].mxu0 %v904
        %v1027 = vpop.f32.mrb[0].mxu0
        %v1028 = vadd.f32 0.0, %v1027
        %v1029 = vpop.f32.mrb[0].mxu0
        %1030 = vmatprep.mubr.f32.mxu0 0.0
        %1031 = vmatmul.mubr.f32.gmra.mrb[0].mxu0 %v907
        %v1032 = vpop.f32.mrb[0].mxu0
        %v1033 = vadd.f32 0.0, %v1032
        %v1034 = vpop.f32.mrb[0].mxu0
        %1035 = vmatprep.mubr.f32.mxu0 0.0
        %1036 = vmatmul.mubr.f32.gmra.mrb[0].mxu0 %v910
        %v1037 = vpop.f32.mrb[0].mxu0
        %v1038 = vadd.f32 0.0, %v1037
        %v1039 = vpop.f32.mrb[0].mxu0
        %1040 = vmatprep.mubr.f32.mxu0 0.0
        %1041 = vmatmul.mubr.f32.gmra.mrb[0].mxu0 %v913
        %v1042 = vpop.f32.mrb[0].mxu0
        %v1043 = vadd.f32 0.0, %v1042
        %v1044 = vpop.f32.mrb[0].mxu0
        %1045 = vmatprep.mubr.f32.mxu0 0.0
        %1046 = vmatmul.mubr.f32.gmra.mrb[0].mxu0 %v916
        %v1047 = vpop.f32.mrb[0].mxu0
        %v1048 = vadd.f32 0.0, %v1047
        %v1049 = vpop.f32.mrb[0].mxu0
        %1050 = vmatprep.mubr.f32.mxu0 0.0
        %1051 = vmatmul.mubr.f32.gmra.mrb[0].mxu0 %v919
        %v1052 = vpop.f32.mrb[0].mxu0
        %v1053 = vadd.f32 0.0, %v1052
        %v1054 = vpop.f32.mrb[0].mxu0
        %1055 = vmatprep.mubr.f32.mxu0 0.0
        %1056 = vmatmul.mubr.f32.gmra.mrb[0].mxu0 %v922
        %v1057 = vpop.f32.mrb[0].mxu0
        %v1058 = vadd.f32 0.0, %v1057
        %v1059 = vpop.f32.mrb[0].mxu0
        %1060 = vmatprep.mubr.f32.mxu0 0.0
        %1061 = vmatmul.mubr.f32.gmra.mrb[0].mxu0 %v925
        %v1062 = vpop.f32.mrb[0].mxu0
        %v1063 = vadd.f32 0.0, %v1062
        %v1064 = vpop.f32.mrb[0].mxu0
        %1065 = vmatprep.mubr.f32.mxu0 0.0
        %1066 = vmatmul.mubr.f32.gmra.mrb[0].mxu0 %v928
        %v1067 = vpop.f32.mrb[0].mxu0
        %v1068 = vadd.f32 0.0, %v1067
        %v1069 = vpop.f32.mrb[0].mxu0
        %1070 = vmatprep.mubr.f32.mxu0 0.0
        %1071 = vmatmul.mubr.f32.gmra.mrb[0].mxu0 %v931
        %v1072 = vpop.f32.mrb[0].mxu0
        %v1073 = vadd.f32 0.0, %v1072
        %v1074 = vpop.f32.mrb[0].mxu0
        %1075 = vmatprep.mubr.f32.mxu0 0.0
        %1076 = vmatmul.mubr.f32.gmra.mrb[0].mxu0 %v934
        %v1077 = vpop.f32.mrb[0].mxu0
        %v1078 = vadd.f32 0.0, %v1077
        %v1079 = vpop.f32.mrb[0].mxu0
        %1080 = vdwg.mxu0
        %v1081 = vrcp.pop %v1003
        %v1082 = vrcp.pop %v1008
        %v1083 = vrcp.pop %v1013
        %v1084 = vrcp.pop %v1018
        %v1085 = vrcp.pop %v1023
        %v1086 = vrcp.pop %v1028
        %v1087 = vrcp.pop %v1033
        %v1088 = vrcp.pop %v1038
        %v1089 = vrcp.pop %v1043
        %v1090 = vrcp.pop %v1048
        %v1091 = vrcp.pop %v1053
        %v1092 = vrcp.pop %v1058
        %v1093 = vrcp.pop %v1063
        %v1094 = vrcp.pop %v1068
        %v1095 = vrcp.pop %v1073
        %v1096 = vrcp.pop %v1078
        %v1097 = vmul.f32 %v848, %v1081
        %v1098 = vmul.f32 %v850, %v1082
        %v1099 = vmul.f32 %v852, %v1083
        %v1100 = vmul.f32 %v854, %v1084
        %v1101 = vmul.f32 %v856, %v1085
        %v1102 = vmul.f32 %v858, %v1086
        %v1103 = vmul.f32 %v860, %v1087
        %v1104 = vmul.f32 %v862, %v1088
        %v1105 = vmul.f32 %v864, %v1089
        %v1106 = vmul.f32 %v866, %v1090
        %v1107 = vmul.f32 %v868, %v1091
        %v1108 = vmul.f32 %v870, %v1092
        %v1109 = vmul.f32 %v872, %v1093
        %v1110 = vmul.f32 %v874, %v1094
        %v1111 = vmul.f32 %v876, %v1095
        %v1112 = vmul.f32 %v878, %v1096
        %v1113 = vld [vmem:[#allocation2 + $0x168] sm:$0xff]
        %v1114 = vld [vmem:[#allocation2 + $0x170] sm:$0xff]
        %v1115 = vld [vmem:[#allocation2 + $0x178] sm:$0xff]
        %v1116 = vld [vmem:[#allocation2 + $0x180] sm:$0xff]
        %v1117 = vld [vmem:[#allocation2 + $0x188] sm:$0xff]
        %v1118 = vld [vmem:[#allocation2 + $0x190] sm:$0xff]
        %v1119 = vld [vmem:[#allocation2 + $0x198] sm:$0xff]
        %v1120 = vld [vmem:[#allocation2 + $0x1a0] sm:$0xff]
        %v1121 = vld [vmem:[#allocation2 + $0x1a8] sm:$0xff]
        %v1122 = vpack.c.bf16 %v1098, %v1097
        %v1123 = vpack.c.bf16 %v1100, %v1099
        %v1124 = vpack.c.bf16 %v1102, %v1101
        %v1125 = vpack.c.bf16 %v1104, %v1103
        %v1126 = vpack.c.bf16 %v1106, %v1105
        %v1127 = vpack.c.bf16 %v1108, %v1107
        %v1128 = vpack.c.bf16 %v1110, %v1109
        %v1129 = vpack.c.bf16 %v1112, %v1111
        %v1130 = vpack.c.bf16 %v1114, %v1113
        %v1131 = vpack.c.bf16 %v1116, %v1115
        %v1132 = vpack.c.bf16 %v1118, %v1117
        %v1133 = vpack.c.bf16 %v1120, %v1119
        %v1134 = vpack.c.bf16 %v1121, %v1121
        %v1135 = vlaneseq
        %v1136 = vshrl.u32 %v1135, 7
        %v1137 = vsub.s32 4, %v1136
        %v1138 = vrot.slane %v177, %v1137
        %v1140 = vsel %vm782, %v1122, 0
        %v1143 = vsel %vm782, %v1123, 0
        %v1146 = vsel %vm782, %v1124, 0
        %v1149 = vsel %vm782, %v1125, 0
        %v1152 = vsel %vm782, %v1126, 0
        %v1155 = vsel %vm782, %v1127, 0
        %v1158 = vsel %vm782, %v1128, 0
        %v1161 = vsel %vm782, %v1129, 0
        %vm1163 = vcmask 1043456
        %v1165 = vsel %vm1163, %v1134, 0
        %1167 = vmatprep.subr.bf16.mxu0 0
        %1168 = vmatpush1.bf16.msra.mxu0 %v1130
        %1169 = vmatprep.subr.bf16.mxu0 0
        %1170 = vmatpush1.bf16.msra.mxu0 %v1131
        %1171 = vmatprep.subr.bf16.mxu0 0
        %1172 = vmatpush1.bf16.msra.mxu0 %v1132
        %1173 = vmatprep.subr.bf16.mxu0 0
        %1174 = vmatpush1.bf16.msra.mxu0 %v1133
        %1175 = vmatprep.subr.bf16.mxu0 0
        %1176 = vmatpush1.bf16.msra.mxu0 %v1165
        %1177 = vmatprep.subr.bf16.mxu0 0
        %1178 = vmatpush1.bf16.msra.mxu0 0
        %1179 = vmatprep.subr.bf16.mxu0 0
        %1180 = vmatpush1.bf16.msra.mxu0 0
        %1181 = vmatprep.subr.bf16.mxu0 0
        %1182 = vmatpush1.bf16.msra.mxu0 0
        %1183 = vmatprep.subr.bf16.mxu0 0
        %1184 = vmatpush1.bf16.msra.mxu0 0
        %1185 = vmatprep.subr.bf16.mxu0 0
        %1186 = vmatpush1.bf16.msra.mxu0 0
        %1187 = vmatprep.subr.bf16.mxu0 0
        %1188 = vmatpush1.bf16.msra.mxu0 0
        %1189 = vmatprep.subr.bf16.mxu0 0
        %1190 = vmatpush1.bf16.msra.mxu0 0
        %1191 = vmatprep.subr.bf16.mxu0 0
        %1192 = vmatpush1.bf16.msra.mxu0 0
        %1193 = vmatprep.subr.bf16.mxu0 0
        %1194 = vmatpush1.bf16.msra.mxu0 0
        %1195 = vmatprep.subr.bf16.mxu0 0
        %1196 = vmatpush1.bf16.msra.mxu0 0
        %1197 = vmatprep.subr.bf16.mxu0 0
        %1198 = vmatpush1.bf16.msra.mxu0 0
        %1199 = vmatprep.mubr.bf16.mxu0 0
        %1200 = vmatmul.mubr.bf16.gmra.mrb[0].mxu0 %v1140
        %v1201 = vpop.f32.mrb[0].mxu0
        %v1202 = vadd.f32 %v1138, %v1201
        %v1203 = vpop.f32.mrb[0].mxu0
        %v1204 = vpop.f32.mrb[0].mxu0
        %v1205 = vadd.f32 %v1138, %v1204
        %v1206 = vpop.f32.mrb[0].mxu0
        %1207 = vmatprep.mubr.bf16.mxu0 0
        %1208 = vmatmul.mubr.bf16.gmra.mrb[0].mxu0 %v1143
        %v1209 = vpop.f32.mrb[0].mxu0
        %v1210 = vadd.f32 %v1138, %v1209
        %v1211 = vpop.f32.mrb[0].mxu0
        %v1212 = vpop.f32.mrb[0].mxu0
        %v1213 = vadd.f32 %v1138, %v1212
        %v1214 = vpop.f32.mrb[0].mxu0
        %1215 = vmatprep.mubr.bf16.mxu0 0
        %1216 = vmatmul.mubr.bf16.gmra.mrb[0].mxu0 %v1146
        %v1217 = vpop.f32.mrb[0].mxu0
        %v1218 = vadd.f32 %v1138, %v1217
        %v1219 = vpop.f32.mrb[0].mxu0
        %v1220 = vpop.f32.mrb[0].mxu0
        %v1221 = vadd.f32 %v1138, %v1220
        %v1222 = vpop.f32.mrb[0].mxu0
        %1223 = vmatprep.mubr.bf16.mxu0 0
        %1224 = vmatmul.mubr.bf16.gmra.mrb[0].mxu0 %v1149
        %v1225 = vpop.f32.mrb[0].mxu0
        %v1226 = vadd.f32 %v1138, %v1225
        %v1227 = vpop.f32.mrb[0].mxu0
        %v1228 = vpop.f32.mrb[0].mxu0
        %v1229 = vadd.f32 %v1138, %v1228
        %v1230 = vpop.f32.mrb[0].mxu0
        %1231 = vmatprep.mubr.bf16.mxu0 0
        %1232 = vmatmul.mubr.bf16.gmra.mrb[0].mxu0 %v1152
        %v1233 = vpop.f32.mrb[0].mxu0
        %v1234 = vadd.f32 %v1138, %v1233
        %v1235 = vpop.f32.mrb[0].mxu0
        %v1236 = vpop.f32.mrb[0].mxu0
        %v1237 = vadd.f32 %v1138, %v1236
        %v1238 = vpop.f32.mrb[0].mxu0
        %1239 = vmatprep.mubr.bf16.mxu0 0
        %1240 = vmatmul.mubr.bf16.gmra.mrb[0].mxu0 %v1155
        %v1241 = vpop.f32.mrb[0].mxu0
        %v1242 = vadd.f32 %v1138, %v1241
        %v1243 = vpop.f32.mrb[0].mxu0
        %v1244 = vpop.f32.mrb[0].mxu0
        %v1245 = vadd.f32 %v1138, %v1244
        %v1246 = vpop.f32.mrb[0].mxu0
        %1247 = vmatprep.mubr.bf16.mxu0 0
        %1248 = vmatmul.mubr.bf16.gmra.mrb[0].mxu0 %v1158
        %v1249 = vpop.f32.mrb[0].mxu0
        %v1250 = vadd.f32 %v1138, %v1249
        %v1251 = vpop.f32.mrb[0].mxu0
        %v1252 = vpop.f32.mrb[0].mxu0
        %v1253 = vadd.f32 %v1138, %v1252
        %v1254 = vpop.f32.mrb[0].mxu0
        %1255 = vmatprep.mubr.bf16.mxu0 0
        %1256 = vmatmul.mubr.bf16.gmra.mrb[0].mxu0 %v1161
        %v1257 = vpop.f32.mrb[0].mxu0
        %v1258 = vadd.f32 %v1138, %v1257
        %v1259 = vpop.f32.mrb[0].mxu0
        %v1260 = vpop.f32.mrb[0].mxu0
        %v1261 = vadd.f32 %v1138, %v1260
        %v1262 = vpop.f32.mrb[0].mxu0
        %1263 = vdwg.mxu0
        %v1264 = vmax.f32 %v1202, 0.0
        %v1265 = vmax.f32 %v1205, 0.0
        %v1266 = vmax.f32 %v1210, 0.0
        %v1267 = vmax.f32 %v1213, 0.0
        %v1268 = vmax.f32 %v1218, 0.0
        %v1269 = vmax.f32 %v1221, 0.0
        %v1270 = vmax.f32 %v1226, 0.0
        %v1271 = vmax.f32 %v1229, 0.0
        %v1272 = vmax.f32 %v1234, 0.0
        %v1273 = vmax.f32 %v1237, 0.0
        %v1274 = vmax.f32 %v1242, 0.0
        %v1275 = vmax.f32 %v1245, 0.0
        %v1276 = vmax.f32 %v1250, 0.0
        %v1277 = vmax.f32 %v1253, 0.0
        %v1278 = vmax.f32 %v1258, 0.0
        %v1279 = vmax.f32 %v1261, 0.0
        %v1280 = vld [vmem:[#allocation2 + $0x1b0] sm:$0xff]
        %v1281 = vld [vmem:[#allocation2 + $0x1b8] sm:$0xff]
        %v1282 = vld [vmem:[#allocation2 + $0x1c0] sm:$0xff]
        %v1283 = vld [vmem:[#allocation2 + $0x1c8] sm:$0xff]
        %v1284 = vld [vmem:[#allocation2 + $0x1d0] sm:$0xff]
        %v1285 = vld [vmem:[#allocation2 + $0x1d8] sm:$0xff]
        %v1286 = vld [vmem:[#allocation2 + $0x1e0] sm:$0xff]
        %v1287 = vld [vmem:[#allocation2 + $0x1e8] sm:$0xff]
        %v1288 = vpack.c.bf16 %v1265, %v1264
        %v1289 = vpack.c.bf16 %v1267, %v1266
        %v1290 = vpack.c.bf16 %v1269, %v1268
        %v1291 = vpack.c.bf16 %v1271, %v1270
        %v1292 = vpack.c.bf16 %v1273, %v1272
        %v1293 = vpack.c.bf16 %v1275, %v1274
        %v1294 = vpack.c.bf16 %v1277, %v1276
        %v1295 = vpack.c.bf16 %v1279, %v1278
        %v1296 = vpack.c.bf16 %v1281, %v1280
        %v1297 = vpack.c.bf16 %v1283, %v1282
        %v1298 = vpack.c.bf16 %v1285, %v1284
        %v1299 = vpack.c.bf16 %v1287, %v1286
        %v1300 = vlaneseq
        %v1301 = vshrl.u32 %v1300, 7
        %v1302 = vsub.s32 5, %v1301
        %v1303 = vrot.slane %v177, %v1302
        %v1305 = vsel %vm367, %v1288, 0
        %v1308 = vsel %vm367, %v1289, 0
        %v1311 = vsel %vm367, %v1290, 0
        %v1314 = vsel %vm367, %v1291, 0
        %v1317 = vsel %vm367, %v1292, 0
        %v1320 = vsel %vm367, %v1293, 0
        %v1323 = vsel %vm367, %v1294, 0
        %v1326 = vsel %vm367, %v1295, 0
        %1328 = vmatprep.subr.bf16.mxu0 0
        %1329 = vmatpush1.bf16.msra.mxu0 %v1296
        %1330 = vmatprep.subr.bf16.mxu0 0
        %1331 = vmatpush1.bf16.msra.mxu0 %v1297
        %1332 = vmatprep.subr.bf16.mxu0 0
        %1333 = vmatpush1.bf16.msra.mxu0 %v1298
        %1334 = vmatprep.subr.bf16.mxu0 0
        %1335 = vmatpush1.bf16.msra.mxu0 %v1299
        %1336 = vmatprep.subr.bf16.mxu0 0
        %1337 = vmatpush1.bf16.msra.mxu0 0
        %1338 = vmatprep.subr.bf16.mxu0 0
        %1339 = vmatpush1.bf16.msra.mxu0 0
        %1340 = vmatprep.subr.bf16.mxu0 0
        %1341 = vmatpush1.bf16.msra.mxu0 0
        %1342 = vmatprep.subr.bf16.mxu0 0
        %1343 = vmatpush1.bf16.msra.mxu0 0
        %1344 = vmatprep.subr.bf16.mxu0 0
        %1345 = vmatpush1.bf16.msra.mxu0 0
        %1346 = vmatprep.subr.bf16.mxu0 0
        %1347 = vmatpush1.bf16.msra.mxu0 0
        %1348 = vmatprep.subr.bf16.mxu0 0
        %1349 = vmatpush1.bf16.msra.mxu0 0
        %1350 = vmatprep.subr.bf16.mxu0 0
        %1351 = vmatpush1.bf16.msra.mxu0 0
        %1352 = vmatprep.subr.bf16.mxu0 0
        %1353 = vmatpush1.bf16.msra.mxu0 0
        %1354 = vmatprep.subr.bf16.mxu0 0
        %1355 = vmatpush1.bf16.msra.mxu0 0
        %1356 = vmatprep.subr.bf16.mxu0 0
        %1357 = vmatpush1.bf16.msra.mxu0 0
        %1358 = vmatprep.subr.bf16.mxu0 0
        %1359 = vmatpush1.bf16.msra.mxu0 0
        %1360 = vmatprep.mubr.bf16.mxu0 0
        %1361 = vmatmul.mubr.bf16.gmra.mrb[0].mxu0 %v1305
        %v1362 = vpop.f32.mrb[0].mxu0
        %v1363 = vadd.f32 %v1303, %v1362
        %v1364 = vpop.f32.mrb[0].mxu0
        %v1365 = vpop.f32.mrb[0].mxu0
        %v1366 = vadd.f32 %v1303, %v1365
        %v1367 = vpop.f32.mrb[0].mxu0
        %1368 = vmatprep.mubr.bf16.mxu0 0
        %1369 = vmatmul.mubr.bf16.gmra.mrb[0].mxu0 %v1308
        %v1370 = vpop.f32.mrb[0].mxu0
        %v1371 = vadd.f32 %v1303, %v1370
        %v1372 = vpop.f32.mrb[0].mxu0
        %v1373 = vpop.f32.mrb[0].mxu0
        %v1374 = vadd.f32 %v1303, %v1373
        %v1375 = vpop.f32.mrb[0].mxu0
        %1376 = vmatprep.mubr.bf16.mxu0 0
        %1377 = vmatmul.mubr.bf16.gmra.mrb[0].mxu0 %v1311
        %v1378 = vpop.f32.mrb[0].mxu0
        %v1379 = vadd.f32 %v1303, %v1378
        %v1380 = vpop.f32.mrb[0].mxu0
        %v1381 = vpop.f32.mrb[0].mxu0
        %v1382 = vadd.f32 %v1303, %v1381
        %v1383 = vpop.f32.mrb[0].mxu0
        %1384 = vmatprep.mubr.bf16.mxu0 0
        %1385 = vmatmul.mubr.bf16.gmra.mrb[0].mxu0 %v1314
        %v1386 = vpop.f32.mrb[0].mxu0
        %v1387 = vadd.f32 %v1303, %v1386
        %v1388 = vpop.f32.mrb[0].mxu0
        %v1389 = vpop.f32.mrb[0].mxu0
        %v1390 = vadd.f32 %v1303, %v1389
        %v1391 = vpop.f32.mrb[0].mxu0
        %1392 = vmatprep.mubr.bf16.mxu0 0
        %1393 = vmatmul.mubr.bf16.gmra.mrb[0].mxu0 %v1317
        %v1394 = vpop.f32.mrb[0].mxu0
        %v1395 = vadd.f32 %v1303, %v1394
        %v1396 = vpop.f32.mrb[0].mxu0
        %v1397 = vpop.f32.mrb[0].mxu0
        %v1398 = vadd.f32 %v1303, %v1397
        %v1399 = vpop.f32.mrb[0].mxu0
        %1400 = vmatprep.mubr.bf16.mxu0 0
        %1401 = vmatmul.mubr.bf16.gmra.mrb[0].mxu0 %v1320
        %v1402 = vpop.f32.mrb[0].mxu0
        %v1403 = vadd.f32 %v1303, %v1402
        %v1404 = vpop.f32.mrb[0].mxu0
        %v1405 = vpop.f32.mrb[0].mxu0
        %v1406 = vadd.f32 %v1303, %v1405
        %v1407 = vpop.f32.mrb[0].mxu0
        %1408 = vmatprep.mubr.bf16.mxu0 0
        %1409 = vmatmul.mubr.bf16.gmra.mrb[0].mxu0 %v1323
        %v1410 = vpop.f32.mrb[0].mxu0
        %v1411 = vadd.f32 %v1303, %v1410
        %v1412 = vpop.f32.mrb[0].mxu0
        %v1413 = vpop.f32.mrb[0].mxu0
        %v1414 = vadd.f32 %v1303, %v1413
        %v1415 = vpop.f32.mrb[0].mxu0
        %1416 = vmatprep.mubr.bf16.mxu0 0
        %1417 = vmatmul.mubr.bf16.gmra.mrb[0].mxu0 %v1326
        %v1418 = vpop.f32.mrb[0].mxu0
        %v1419 = vadd.f32 %v1303, %v1418
        %v1420 = vpop.f32.mrb[0].mxu0
        %v1421 = vpop.f32.mrb[0].mxu0
        %v1422 = vadd.f32 %v1303, %v1421
        %v1423 = vpop.f32.mrb[0].mxu0
        %1424 = vdwg.mxu0
        %v1425 = vmax.f32 %v1363, 0.0
        %v1426 = vmax.f32 %v1366, 0.0
        %v1427 = vmax.f32 %v1371, 0.0
        %v1428 = vmax.f32 %v1374, 0.0
        %v1429 = vmax.f32 %v1379, 0.0
        %v1430 = vmax.f32 %v1382, 0.0
        %v1431 = vmax.f32 %v1387, 0.0
        %v1432 = vmax.f32 %v1390, 0.0
        %v1433 = vmax.f32 %v1395, 0.0
        %v1434 = vmax.f32 %v1398, 0.0
        %v1435 = vmax.f32 %v1403, 0.0
        %v1436 = vmax.f32 %v1406, 0.0
        %v1437 = vmax.f32 %v1411, 0.0
        %v1438 = vmax.f32 %v1414, 0.0
        %v1439 = vmax.f32 %v1419, 0.0
        %v1440 = vmax.f32 %v1422, 0.0
        %v1441 = vld [vmem:[#allocation2 + $0x1f0] sm:$0xff]
        %v1442 = vld [vmem:[#allocation2 + $0x1f8] sm:$0xff]
        %v1443 = vld [vmem:[#allocation2 + $0x200] sm:$0xff]
        %v1444 = vld [vmem:[#allocation2 + $0x208] sm:$0xff]
        %v1445 = vld [vmem:[#allocation2 + $0x210] sm:$0xff]
        %v1446 = vld [vmem:[#allocation2 + $0x218] sm:$0xff]
        %v1447 = vld [vmem:[#allocation2 + $0x220] sm:$0xff]
        %v1448 = vld [vmem:[#allocation2 + $0x228] sm:$0xff]
        %v1449 = vpack.c.bf16 %v490, %v489
        %v1450 = vpack.c.bf16 %v492, %v491
        %v1451 = vpack.c.bf16 %v494, %v493
        %v1452 = vpack.c.bf16 %v496, %v495
        %v1453 = vpack.c.bf16 %v498, %v497
        %v1454 = vpack.c.bf16 %v500, %v499
        %v1455 = vpack.c.bf16 %v502, %v501
        %v1456 = vpack.c.bf16 %v504, %v503
        %v1457 = vpack.c.bf16 %v1442, %v1441
        %v1458 = vpack.c.bf16 %v1444, %v1443
        %v1459 = vpack.c.bf16 %v1446, %v1445
        %v1460 = vpack.c.bf16 %v1448, %v1447
        %v1461 = vlaneseq
        %v1462 = vshrl.u32 %v1461, 7
        %v1463 = vsub.s32 6, %v1462
        %v1464 = vrot.slane %v177, %v1463
        %v1466 = vsel %vm367, %v1449, 0
        %v1469 = vsel %vm367, %v1450, 0
        %v1472 = vsel %vm367, %v1451, 0
        %v1475 = vsel %vm367, %v1452, 0
        %v1478 = vsel %vm367, %v1453, 0
        %v1481 = vsel %vm367, %v1454, 0
        %v1484 = vsel %vm367, %v1455, 0
        %v1487 = vsel %vm367, %v1456, 0
        %1489 = vmatprep.subr.bf16.mxu0 0
        %1490 = vmatpush1.bf16.msra.mxu0 %v1457
        %1491 = vmatprep.subr.bf16.mxu0 0
        %1492 = vmatpush1.bf16.msra.mxu0 %v1458
        %1493 = vmatprep.subr.bf16.mxu0 0
        %1494 = vmatpush1.bf16.msra.mxu0 %v1459
        %1495 = vmatprep.subr.bf16.mxu0 0
        %1496 = vmatpush1.bf16.msra.mxu0 %v1460
        %1497 = vmatprep.subr.bf16.mxu0 0
        %1498 = vmatpush1.bf16.msra.mxu0 0
        %1499 = vmatprep.subr.bf16.mxu0 0
        %1500 = vmatpush1.bf16.msra.mxu0 0
        %1501 = vmatprep.subr.bf16.mxu0 0
        %1502 = vmatpush1.bf16.msra.mxu0 0
        %1503 = vmatprep.subr.bf16.mxu0 0
        %1504 = vmatpush1.bf16.msra.mxu0 0
        %1505 = vmatprep.subr.bf16.mxu0 0
        %1506 = vmatpush1.bf16.msra.mxu0 0
        %1507 = vmatprep.subr.bf16.mxu0 0
        %1508 = vmatpush1.bf16.msra.mxu0 0
        %1509 = vmatprep.subr.bf16.mxu0 0
        %1510 = vmatpush1.bf16.msra.mxu0 0
        %1511 = vmatprep.subr.bf16.mxu0 0
        %1512 = vmatpush1.bf16.msra.mxu0 0
        %1513 = vmatprep.subr.bf16.mxu0 0
        %1514 = vmatpush1.bf16.msra.mxu0 0
        %1515 = vmatprep.subr.bf16.mxu0 0
        %1516 = vmatpush1.bf16.msra.mxu0 0
        %1517 = vmatprep.subr.bf16.mxu0 0
        %1518 = vmatpush1.bf16.msra.mxu0 0
        %1519 = vmatprep.subr.bf16.mxu0 0
        %1520 = vmatpush1.bf16.msra.mxu0 0
        %1521 = vmatprep.mubr.bf16.mxu0 0
        %1522 = vmatmul.mubr.bf16.gmra.mrb[0].mxu0 %v1466
        %v1523 = vpop.f32.mrb[0].mxu0
        %v1524 = vadd.f32 %v1464, %v1523
        %v1525 = vpop.f32.mrb[0].mxu0
        %v1526 = vpop.f32.mrb[0].mxu0
        %v1527 = vadd.f32 %v1464, %v1526
        %v1528 = vpop.f32.mrb[0].mxu0
        %1529 = vmatprep.mubr.bf16.mxu0 0
        %1530 = vmatmul.mubr.bf16.gmra.mrb[0].mxu0 %v1469
        %v1531 = vpop.f32.mrb[0].mxu0
        %v1532 = vadd.f32 %v1464, %v1531
        %v1533 = vpop.f32.mrb[0].mxu0
        %v1534 = vpop.f32.mrb[0].mxu0
        %v1535 = vadd.f32 %v1464, %v1534
        %v1536 = vpop.f32.mrb[0].mxu0
        %1537 = vmatprep.mubr.bf16.mxu0 0
        %1538 = vmatmul.mubr.bf16.gmra.mrb[0].mxu0 %v1472
        %v1539 = vpop.f32.mrb[0].mxu0
        %v1540 = vadd.f32 %v1464, %v1539
        %v1541 = vpop.f32.mrb[0].mxu0
        %v1542 = vpop.f32.mrb[0].mxu0
        %v1543 = vadd.f32 %v1464, %v1542
        %v1544 = vpop.f32.mrb[0].mxu0
        %1545 = vmatprep.mubr.bf16.mxu0 0
        %1546 = vmatmul.mubr.bf16.gmra.mrb[0].mxu0 %v1475
        %v1547 = vpop.f32.mrb[0].mxu0
        %v1548 = vadd.f32 %v1464, %v1547
        %v1549 = vpop.f32.mrb[0].mxu0
        %v1550 = vpop.f32.mrb[0].mxu0
        %v1551 = vadd.f32 %v1464, %v1550
        %v1552 = vpop.f32.mrb[0].mxu0
        %1553 = vmatprep.mubr.bf16.mxu0 0
        %1554 = vmatmul.mubr.bf16.gmra.mrb[0].mxu0 %v1478
        %v1555 = vpop.f32.mrb[0].mxu0
        %v1556 = vadd.f32 %v1464, %v1555
        %v1557 = vpop.f32.mrb[0].mxu0
        %v1558 = vpop.f32.mrb[0].mxu0
        %v1559 = vadd.f32 %v1464, %v1558
        %v1560 = vpop.f32.mrb[0].mxu0
        %1561 = vmatprep.mubr.bf16.mxu0 0
        %1562 = vmatmul.mubr.bf16.gmra.mrb[0].mxu0 %v1481
        %v1563 = vpop.f32.mrb[0].mxu0
        %v1564 = vadd.f32 %v1464, %v1563
        %v1565 = vpop.f32.mrb[0].mxu0
        %v1566 = vpop.f32.mrb[0].mxu0
        %v1567 = vadd.f32 %v1464, %v1566
        %v1568 = vpop.f32.mrb[0].mxu0
        %1569 = vmatprep.mubr.bf16.mxu0 0
        %1570 = vmatmul.mubr.bf16.gmra.mrb[0].mxu0 %v1484
        %v1571 = vpop.f32.mrb[0].mxu0
        %v1572 = vadd.f32 %v1464, %v1571
        %v1573 = vpop.f32.mrb[0].mxu0
        %v1574 = vpop.f32.mrb[0].mxu0
        %v1575 = vadd.f32 %v1464, %v1574
        %v1576 = vpop.f32.mrb[0].mxu0
        %1577 = vmatprep.mubr.bf16.mxu0 0
        %1578 = vmatmul.mubr.bf16.gmra.mrb[0].mxu0 %v1487
        %v1579 = vpop.f32.mrb[0].mxu0
        %v1580 = vadd.f32 %v1464, %v1579
        %v1581 = vpop.f32.mrb[0].mxu0
        %v1582 = vpop.f32.mrb[0].mxu0
        %v1583 = vadd.f32 %v1464, %v1582
        %v1584 = vpop.f32.mrb[0].mxu0
        %1585 = vdwg.mxu0
        %v1586 = vld [vmem:[#allocation2 + $0x230] sm:$0xff]
        %v1587 = vld [vmem:[#allocation2 + $0x238] sm:$0xff]
        %v1588 = vpack.c.bf16 %v1426, %v1425
        %v1589 = vpack.c.bf16 %v1428, %v1427
        %v1590 = vpack.c.bf16 %v1430, %v1429
        %v1591 = vpack.c.bf16 %v1432, %v1431
        %v1592 = vpack.c.bf16 %v1434, %v1433
        %v1593 = vpack.c.bf16 %v1436, %v1435
        %v1594 = vpack.c.bf16 %v1438, %v1437
        %v1595 = vpack.c.bf16 %v1440, %v1439
        %v1596 = vpack.c.bf16 %v1587, %v1586
        %vm1597 = vcmask 130048
        %v1599 = vsel %vm1597, %v1588, 0
        %v1602 = vsel %vm1597, %v1589, 0
        %v1605 = vsel %vm1597, %v1590, 0
        %v1608 = vsel %vm1597, %v1591, 0
        %v1611 = vsel %vm1597, %v1592, 0
        %v1614 = vsel %vm1597, %v1593, 0
        %v1617 = vsel %vm1597, %v1594, 0
        %v1620 = vsel %vm1597, %v1595, 0
        %1622 = vmatprep.subr.bf16.mxu0 0
        %1623 = vmatpush1.bf16.msra.mxu0 %v1596
        %1624 = vmatprep.subr.bf16.mxu0 0
        %1625 = vmatpush1.bf16.msra.mxu0 0
        %1626 = vmatprep.subr.bf16.mxu0 0
        %1627 = vmatpush1.bf16.msra.mxu0 0
        %1628 = vmatprep.subr.bf16.mxu0 0
        %1629 = vmatpush1.bf16.msra.mxu0 0
        %1630 = vmatprep.subr.bf16.mxu0 0
        %1631 = vmatpush1.bf16.msra.mxu0 0
        %1632 = vmatprep.subr.bf16.mxu0 0
        %1633 = vmatpush1.bf16.msra.mxu0 0
        %1634 = vmatprep.subr.bf16.mxu0 0
        %1635 = vmatpush1.bf16.msra.mxu0 0
        %1636 = vmatprep.subr.bf16.mxu0 0
        %1637 = vmatpush1.bf16.msra.mxu0 0
        %1638 = vmatprep.subr.bf16.mxu0 0
        %1639 = vmatpush1.bf16.msra.mxu0 0
        %1640 = vmatprep.subr.bf16.mxu0 0
        %1641 = vmatpush1.bf16.msra.mxu0 0
        %1642 = vmatprep.subr.bf16.mxu0 0
        %1643 = vmatpush1.bf16.msra.mxu0 0
        %1644 = vmatprep.subr.bf16.mxu0 0
        %1645 = vmatpush1.bf16.msra.mxu0 0
        %1646 = vmatprep.subr.bf16.mxu0 0
        %1647 = vmatpush1.bf16.msra.mxu0 0
        %1648 = vmatprep.subr.bf16.mxu0 0
        %1649 = vmatpush1.bf16.msra.mxu0 0
        %1650 = vmatprep.subr.bf16.mxu0 0
        %1651 = vmatpush1.bf16.msra.mxu0 0
        %1652 = vmatprep.subr.bf16.mxu0 0
        %1653 = vmatpush1.bf16.msra.mxu0 0
        %1654 = vmatprep.mubr.bf16.mxu0 0
        %1655 = vmatmul.mubr.bf16.gmra.mrb[0].mxu0 %v1599
        %v1656 = vpop.f32.mrb[0].mxu0
        %v1657 = vadd.f32 0.0, %v1656
        %v1658 = vpop.f32.mrb[0].mxu0
        %v1659 = vpop.f32.mrb[0].mxu0
        %v1660 = vadd.f32 0.0, %v1659
        %v1661 = vpop.f32.mrb[0].mxu0
        %1662 = vmatprep.mubr.bf16.mxu0 0
        %1663 = vmatmul.mubr.bf16.gmra.mrb[0].mxu0 %v1602
        %v1664 = vpop.f32.mrb[0].mxu0
        %v1665 = vadd.f32 0.0, %v1664
        %v1666 = vpop.f32.mrb[0].mxu0
        %v1667 = vpop.f32.mrb[0].mxu0
        %v1668 = vadd.f32 0.0, %v1667
        %v1669 = vpop.f32.mrb[0].mxu0
        %1670 = vmatprep.mubr.bf16.mxu0 0
        %1671 = vmatmul.mubr.bf16.gmra.mrb[0].mxu0 %v1605
        %v1672 = vpop.f32.mrb[0].mxu0
        %v1673 = vadd.f32 0.0, %v1672
        %v1674 = vpop.f32.mrb[0].mxu0
        %v1675 = vpop.f32.mrb[0].mxu0
        %v1676 = vadd.f32 0.0, %v1675
        %v1677 = vpop.f32.mrb[0].mxu0
        %1678 = vmatprep.mubr.bf16.mxu0 0
        %1679 = vmatmul.mubr.bf16.gmra.mrb[0].mxu0 %v1608
        %v1680 = vpop.f32.mrb[0].mxu0
        %v1681 = vadd.f32 0.0, %v1680
        %v1682 = vpop.f32.mrb[0].mxu0
        %v1683 = vpop.f32.mrb[0].mxu0
        %v1684 = vadd.f32 0.0, %v1683
        %v1685 = vpop.f32.mrb[0].mxu0
        %1686 = vmatprep.mubr.bf16.mxu0 0
        %1687 = vmatmul.mubr.bf16.gmra.mrb[0].mxu0 %v1611
        %v1688 = vpop.f32.mrb[0].mxu0
        %v1689 = vadd.f32 0.0, %v1688
        %v1690 = vpop.f32.mrb[0].mxu0
        %v1691 = vpop.f32.mrb[0].mxu0
        %v1692 = vadd.f32 0.0, %v1691
        %v1693 = vpop.f32.mrb[0].mxu0
        %1694 = vmatprep.mubr.bf16.mxu0 0
        %1695 = vmatmul.mubr.bf16.gmra.mrb[0].mxu0 %v1614
        %v1696 = vpop.f32.mrb[0].mxu0
        %v1697 = vadd.f32 0.0, %v1696
        %v1698 = vpop.f32.mrb[0].mxu0
        %v1699 = vpop.f32.mrb[0].mxu0
        %v1700 = vadd.f32 0.0, %v1699
        %v1701 = vpop.f32.mrb[0].mxu0
        %1702 = vmatprep.mubr.bf16.mxu0 0
        %1703 = vmatmul.mubr.bf16.gmra.mrb[0].mxu0 %v1617
        %v1704 = vpop.f32.mrb[0].mxu0
        %v1705 = vadd.f32 0.0, %v1704
        %v1706 = vpop.f32.mrb[0].mxu0
        %v1707 = vpop.f32.mrb[0].mxu0
        %v1708 = vadd.f32 0.0, %v1707
        %v1709 = vpop.f32.mrb[0].mxu0
        %1710 = vmatprep.mubr.bf16.mxu0 0
        %1711 = vmatmul.mubr.bf16.gmra.mrb[0].mxu0 %v1620
        %v1712 = vpop.f32.mrb[0].mxu0
        %v1713 = vadd.f32 0.0, %v1712
        %v1714 = vpop.f32.mrb[0].mxu0
        %v1715 = vpop.f32.mrb[0].mxu0
        %v1716 = vadd.f32 0.0, %v1715
        %v1717 = vpop.f32.mrb[0].mxu0
        %1718 = vdwg.mxu0
        %v1719 = vadd.f32 %v1524, %v1657
        %v1720 = vadd.f32 %v1527, %v1660
        %v1721 = vadd.f32 %v1532, %v1665
        %v1722 = vadd.f32 %v1535, %v1668
        %v1723 = vadd.f32 %v1540, %v1673
        %v1724 = vadd.f32 %v1543, %v1676
        %v1725 = vadd.f32 %v1548, %v1681
        %v1726 = vadd.f32 %v1551, %v1684
        %v1727 = vadd.f32 %v1556, %v1689
        %v1728 = vadd.f32 %v1559, %v1692
        %v1729 = vadd.f32 %v1564, %v1697
        %v1730 = vadd.f32 %v1567, %v1700
        %v1731 = vadd.f32 %v1572, %v1705
        %v1732 = vadd.f32 %v1575, %v1708
        %v1733 = vadd.f32 %v1580, %v1713
        %v1734 = vadd.f32 %v1583, %v1716
        %1735 = vst [vmem:[%s152] sm:$0xff] %v1719
        %1736 = vst [vmem:[%s152 + $0x8] sm:$0xff] %v1720
        %1737 = vst [vmem:[%s152 + $0x10] sm:$0xff] %v1721
        %1738 = vst [vmem:[%s152 + $0x18] sm:$0xff] %v1722
        %1739 = vst [vmem:[%s152 + $0x20] sm:$0xff] %v1723
        %1740 = vst [vmem:[%s152 + $0x28] sm:$0xff] %v1724
        %1741 = vst [vmem:[%s152 + $0x30] sm:$0xff] %v1725
        %1742 = vst [vmem:[%s152 + $0x38] sm:$0xff] %v1726
        %1743 = vst [vmem:[%s152 + $0x40] sm:$0xff] %v1727
        %1744 = vst [vmem:[%s152 + $0x48] sm:$0xff] %v1728
        %1745 = vst [vmem:[%s152 + $0x50] sm:$0xff] %v1729
        %1746 = vst [vmem:[%s152 + $0x58] sm:$0xff] %v1730
        %1747 = vst [vmem:[%s152 + $0x60] sm:$0xff] %v1731
        %1748 = vst [vmem:[%s152 + $0x68] sm:$0xff] %v1732
        %1749 = vst [vmem:[%s152 + $0x70] sm:$0xff] %v1733
        %1750 = vst [vmem:[%s152 + $0x78] sm:$0xff] %v1734
        %s1751 = sand.u32 %s72, 1
        %s1752 = scalar_lea.sflag [#allocation4], %s1751
        %s1753 = sand.u32 %s72, 1
        %s1754 = smul.addr %s1753, 128
        %s1755 = scalar_lea.vmem [#allocation5], %s1754
        // Predicated region
        $region33: #{tpu_custom_call.1} parent=27 // pred_check
          %p1756 = pneg %p82
        $region34: #{tpu_custom_call.1} parent=27 // pred_check_branch
          %1758 = sbr.rel (%p1756) target = $region36
        $region35: #{tpu_custom_call.1} parent=27 // pred_region
          %s1759 = smul.u32 16, %s17
          %s1761 = ssub.s32 2048, 2048
          %1762 = vsyncadd %s1752, %s1761
          %s1763 = smul.addr %s1759, 128
          %s1764 = scalar_lea.hbm %s2, %s1763
          %s1765 = sshll.u32 %s1755, 4
          %s1766 = int_to_ptr.vmem [resolvable:$true] %s1765
          %1771 = dma.vmem_to_hbm [thread:$0]  %s1766, 2048, %s1764, %s1752, 128, 128, 8
        $region36: #{tpu_custom_call.1} parent=27 // pred_fallthru
          _
      $region28: #{tpu_custom_call.1} parent=5 // pred_fallthru
        _
      %p1772 = scmp.le.s32.totalorder 2, %s12
      // Predicated region
      $region37: #{tpu_custom_call.1} parent=5 // pred_check
        %p1773 = pneg %p1772
      $region38: #{tpu_custom_call.1} parent=5 // pred_check_branch
        %1775 = sbr.rel (%p1773) target = $region40
      $region39: #{tpu_custom_call.1} parent=5 // pred_region
        %s1776 = ssub.s32 %s12, 2
        // Predicated region
        $region41: #{tpu_custom_call.1} parent=39 // pred_check
          %p1777 = pneg %p88
        $region42: #{tpu_custom_call.1} parent=39 // pred_check_branch
          %1779 = sbr.rel (%p1777) target = $region44
        $region43: #{tpu_custom_call.1} parent=39 // pred_region
          %s1780 = sand.u32 %s73, 1
          %s1781 = scalar_lea.sflag [#allocation4], %s1780
          %s1782 = sand.u32 %s73, 1
          %s1783 = smul.addr %s1782, 128
          %s1784 = scalar_lea.vmem [#allocation5], %s1783
          %1785 = dma.done %s1781, 2048
        $region44: #{tpu_custom_call.1} parent=39 // pred_fallthru
          _
      $region40: #{tpu_custom_call.1} parent=5 // pred_fallthru
        _
    $region6: #{tpu_custom_call.1} parent=1 // loop_footer
      %s16 = sadd.s32 1, %s12
    $region7: #{tpu_custom_call.1} parent=1 // loop_footer_branch
      %11 = sbr.rel target = $region3
    $region8: #{tpu_custom_call.1} parent=1 // loop_exit
      _
    %1786 = vsyncpa [#allocation3], 1
    %s1787 = scalar_lea.sflag [#allocation3], 1
    %1788 = vsyncpa %s1787, 1
    %1789 = vsyncpa [#allocation4], 1
    %s1790 = scalar_lea.sflag [#allocation4], 1
    %1791 = vsyncpa %s1790, 1

</llo_original>
